<compile_context>
chip_gen: v6e
topology: v6e:2x2x1
jax: 0.10.0
libtpu: 0.0.40
codegen_flags: <defaults>
</compile_context>

<pallas_src>
import functools

import jax
import jax.numpy as jnp
from jax import lax
from jax.experimental import pallas as pl
from jax.experimental.pallas import tpu as pltpu


def _ceil_div(a, b):
    return -(-a // b)


def _round_up(a, m):
    return _ceil_div(a, m) * m


def _df_kernel(q_ref, k_ref, w_ref, idx_ref, *, scale, topk, scale_after):
    # q_ref: (BB, TM, C)   k_ref: (BB, Nk, C)
    # w_ref: (BB, TM, topk)   idx_ref: (BB, TM, topk)
    q = q_ref[...]
    k = k_ref[...]

    # (BB, TM, Nk) logits on the MXU: operands in their native dtype (bf16 runs at
    # full MXU rate), f32 accumulation. No materialized transpose of the key.
    logits = jnp.einsum("bqc,bkc->bqk", q, k, preferred_element_type=jnp.float32)
    if not scale_after:
        # Non-positive user-supplied scale is not order-preserving: scale before top-k.
        logits = logits * jnp.float32(scale)

    nk = logits.shape[-1]
    # (1, 1, Nk) iota, broadcast inside the compares (no standalone (TM, Nk) i32 tile).
    col_ids = lax.broadcasted_iota(jnp.int32, (1, 1, nk), 2)
    neg_inf = jnp.float32(-jnp.inf)

    # Unrolled iterative top-k (topk is small & static). Ties resolve to the lowest
    # index, matching lax.top_k / torch.topk behaviour on distinct values.
    work = logits
    vals, idxs = [], []
    for t in range(topk):
        m = jnp.max(work, axis=-1, keepdims=True)                          # (BB,TM,1)
        hit = work == m
        idx = jnp.min(jnp.where(hit, col_ids, nk), axis=-1, keepdims=True)  # (BB,TM,1)
        vals.append(m)
        idxs.append(idx)
        if t + 1 < topk:  # skip the re-masking pass on the last iteration
            work = jnp.where(col_ids == idx, neg_inf, work)

    # Softmax over the k selected logits. Scale is applied here (TM*topk multiplies
    # instead of TM*C before the MXU); vals[0] is the per-row max (descending order).
    if scale_after:
        vals = [v * jnp.float32(scale) for v in vals]
    m0 = vals[0]
    exps = [jnp.exp(v - m0) for v in vals]
    denom = exps[0]
    for e in exps[1:]:
        denom = denom + e
    inv = 1.0 / denom

    # Two full-tile stores instead of 2*topk masked 1-wide column stores.
    w_ref[...] = (jnp.concatenate(exps, axis=-1) * inv).astype(w_ref.dtype)
    idx_ref[...] = jnp.concatenate(idxs, axis=-1)


def df_routing_pallas(query, key, *, topk, scale, tm=128, bb=None):
    """query: (B, Nq, C), key: (B, Nk, C) -> (r_weight (B,Nq,topk), topk_index (B,Nq,topk))."""
    B, Nq, C = query.shape
    Bk, Nk, Ck = key.shape
    assert B == Bk and C == Ck
    assert topk <= Nk

    # --- tiling ---------------------------------------------------------------
    # Query-row tile: all rows when they fit in one tile, else 8-aligned tiles.
    if Nq <= tm:
        tm = Nq
    else:
        tm = max(8, (tm // 8) * 8)

    # Batch blocking: several batch elements per grid step to amortize per-step
    # overhead at DF's typical tiny shapes (N ~ 49-196, C ~ 32-128).
    if bb is None:
        bb = max(1, min(B, 512 // max(tm, 1)))
    bb = max(1, min(bb, B))

    # Large-Nk VMEM guard: the live (bb, tm, Nk) f32/i32 temporaries dominate the
    # footprint; keep them under ~24 MiB (fits v5e scoped default / v7x 64 MiB).
    while bb > 1 and 4 * bb * tm * Nk * 4 > (24 << 20):
        bb = _ceil_div(bb, 2)
    while tm > 32 and 4 * bb * tm * Nk * 4 > (24 << 20):
        tm = max(32, _round_up(tm // 2, 8))

    # Megacore / 2-TC parts: keep at least 2 grid steps along a parallel axis.
    if _ceil_div(B, bb) * _ceil_div(Nq, tm) < 2:
        if B >= 2:
            bb = _ceil_div(B, 2)
        elif Nq >= 16:
            tm = _round_up(_ceil_div(Nq, 2), 8)

    grid = (_ceil_div(B, bb), _ceil_div(Nq, tm))

    # --- compiler params / cost -------------------------------------------------
    itemsize = jnp.dtype(query.dtype).itemsize
    est = (2 * bb * tm * C * itemsize            # double-buffered query tiles
           + 2 * bb * Nk * C * itemsize          # double-buffered key block
           + 4 * bb * tm * Nk * 4                # live (tm, Nk) f32/i32 temporaries
           + 4 * bb * tm * topk * (itemsize + 4))
    vmem_limit_bytes = int(min(max(int(1.25 * est) + (2 << 20), 32 << 20), 64 << 20))

    cost = pl.CostEstimate(
        flops=int(2 * B * Nq * Nk * C),
        transcendentals=int(B * Nq * topk),
        bytes_accessed=int(query.size * itemsize + key.size * itemsize
                           + B * Nq * topk * (itemsize + 4)),
    )

    scale = float(scale)
    kernel = functools.partial(_df_kernel, scale=scale, topk=topk,
                               scale_after=scale > 0.0)

    r_weight, topk_index = pl.pallas_call(
        kernel,
        out_shape=(
            jax.ShapeDtypeStruct((B, Nq, topk), query.dtype),
            jax.ShapeDtypeStruct((B, Nq, topk), jnp.int32),
        ),
        grid=grid,
        in_specs=[
            # query tile: (bb, tm, C) per grid step
            pl.BlockSpec((bb, tm, C), lambda b, i: (b, i, 0)),
            # full key for this batch block; constant over i -> stays VMEM-resident
            pl.BlockSpec((bb, Nk, C), lambda b, i: (b, 0, 0)),
        ],
        out_specs=(
            pl.BlockSpec((bb, tm, topk), lambda b, i: (b, i, 0)),
            pl.BlockSpec((bb, tm, topk), lambda b, i: (b, i, 0)),
        ),
        compiler_params=pltpu.CompilerParams(
            dimension_semantics=("parallel", "parallel"),
            vmem_limit_bytes=vmem_limit_bytes),
        cost_estimate=cost,
    )(query, key)

    return r_weight, topk_index


class DFPallas:
    """JAX/Pallas equivalent of the PyTorch DF routing module (forward pass)."""

    def __init__(self, qk_dim, topk=4, qk_scale=None, param_routing=False,
                 diff_routing=False, key=None, dtype=jnp.float32):
        self.topk = topk
        self.qk_dim = qk_dim
        self.scale = qk_scale or qk_dim ** (-0.5)
        self.diff_routing = diff_routing  # detach() is a no-op in the forward pass
        self.param_routing = param_routing
        if param_routing:
            if key is None:
                key = jax.random.PRNGKey(0)
            kw, kb = jax.random.split(key)
            limit = 1.0 / (qk_dim ** 0.5)
            self.emb_weight = jax.random.uniform(
                kw, (qk_dim, qk_dim), dtype, minval=-limit, maxval=limit)
            self.emb_bias = jax.random.uniform(
                kb, (qk_dim,), dtype, minval=-limit, maxval=limit)
        else:
            self.emb_weight = None
            self.emb_bias = None

    def __call__(self, query, key):
        # self.emb: nn.Identity() when param_routing=False (default); otherwise a tiny
        # shared Linear applied to both query and key before routing.
        if self.emb_weight is not None:
            query = query @ self.emb_weight.T + self.emb_bias
            key = key @ self.emb_weight.T + self.emb_bias
        return df_routing_pallas(query, key, topk=self.topk, scale=self.scale)


if __name__ == "__main__":
    rng = jax.random.PRNGKey(0)
    kq, kk = jax.random.split(rng)

    # (B, N, C) = (batch, num_regions, qk_dim) -- the shapes DF.forward operates on.
    B, N, C = 2, 64, 32
    topk = 4
    query = jax.random.normal(kq, (B, N, C), jnp.float32)
    key = jax.random.normal(kk, (B, N, C), jnp.float32)

    mod = DFPallas(qk_dim=C, topk=topk)
    r_weight, topk_index = mod(query, key)
    r_weight, topk_index = jax.block_until_ready((r_weight, topk_index))

    # Reference check against plain JAX (same math as the PyTorch module).
    scale = C ** (-0.5)
    logits = jnp.einsum("bnc,bmc->bnm", query * scale, key)
    ref_vals, ref_idx = jax.lax.top_k(logits, topk)
    ref_w = jax.nn.softmax(ref_vals, axis=-1)

    assert r_weight.shape == (B, N, topk)
    assert topk_index.shape == (B, N, topk)
    assert jnp.allclose(r_weight, ref_w, atol=1e-5)
    assert jnp.array_equal(topk_index, ref_idx.astype(jnp.int32))

    print("KERNEL_OK")
</pallas_src>

<mosaic_0001>
module attributes {stable_mosaic.version = 11 : i64} {
  func.func @_df_kernel(%arg0: i32, %arg1: i32, %arg2: memref<1x64x32xf32, #tpu.memory_space<vmem>>, %arg3: memref<1x64x32xf32, #tpu.memory_space<vmem>>, %arg4: memref<1x64x4xf32, #tpu.memory_space<vmem>>, %arg5: memref<1x64x4xi32, #tpu.memory_space<vmem>>) attributes {dimension_semantics = [#tpu.dimension_semantics<parallel>, #tpu.dimension_semantics<parallel>], iteration_bounds = array<i64: 2, 1>, scalar_prefetch = 0 : i64, scratch_operands = 0 : i64, tpu.core_type = #tpu.core_type<tc>, window_params = [{transform_indices = @transform_0, window_bounds = array<i64: 1, 64, 32>}, {transform_indices = @transform_1, window_bounds = array<i64: 1, 64, 32>}, {transform_indices = @transform_2, window_bounds = array<i64: 1, 64, 4>}, {transform_indices = @transform_3, window_bounds = array<i64: 1, 64, 4>}]} {
    %c0 = arith.constant 0 : index
    %c0_0 = arith.constant 0 : index
    %c0_1 = arith.constant 0 : index
    %0 = vector.load %arg2[%c0, %c0_0, %c0_1] : memref<1x64x32xf32, #tpu.memory_space<vmem>>, vector<1x64x32xf32>
    %c0_2 = arith.constant 0 : index
    %c0_3 = arith.constant 0 : index
    %c0_4 = arith.constant 0 : index
    %1 = vector.load %arg3[%c0_2, %c0_3, %c0_4] : memref<1x64x32xf32, #tpu.memory_space<vmem>>, vector<1x64x32xf32>
    "tpu.trace_start"() <{level = 10 : i32, message = "bqc,bkc->bqk"}> : () -> ()
    %cst = arith.constant dense<0.000000e+00> : vector<1x64x64xf32>
    %2 = tpu.matmul %0, %1, %cst {dimension_numbers = #tpu.dot_dimension_numbers<[2], [2], [1], [1], [0, 0, 0, 1, 1, 1], [0], [0]>} : vector<1x64x32xf32>, vector<1x64x32xf32>, vector<1x64x64xf32> -> vector<1x64x64xf32>
    "tpu.trace_stop"() : () -> ()
    %3 = tpu.iota {dimensions = array<i32: 2>} : vector<1x1x64xi32>
    %cst_5 = arith.constant dense<0xFF800000> : vector<1x64xf32>
    %4 = vector.multi_reduction <maximumf>, %2, %cst_5 [2] : vector<1x64x64xf32> to vector<1x64xf32>
    %5 = vector.shape_cast %4 : vector<1x64xf32> to vector<1x64x1xf32>
    %6 = vector.broadcast %5 : vector<1x64x1xf32> to vector<1x64x64xf32>
    %7 = arith.cmpf oeq, %2, %6 : vector<1x64x64xf32>
    %c64_i32 = arith.constant 64 : i32
    %8 = vector.shape_cast %3 : vector<1x1x64xi32> to vector<1x1x64xi32>
    %9 = vector.broadcast %8 : vector<1x1x64xi32> to vector<1x64x64xi32>
    %10 = vector.broadcast %c64_i32 : i32 to vector<1x64x64xi32>
    %11 = arith.select %7, %9, %10 : vector<1x64x64xi1>, vector<1x64x64xi32>
    %cst_6 = arith.constant dense<2147483647> : vector<1x64xi32>
    %12 = vector.multi_reduction <minsi>, %11, %cst_6 [2] : vector<1x64x64xi32> to vector<1x64xi32>
    %13 = vector.shape_cast %12 : vector<1x64xi32> to vector<1x64x1xi32>
    %14 = vector.broadcast %3 : vector<1x1x64xi32> to vector<1x64x64xi32>
    %15 = vector.broadcast %13 : vector<1x64x1xi32> to vector<1x64x64xi32>
    %16 = arith.cmpi eq, %14, %15 : vector<1x64x64xi32>
    %cst_7 = arith.constant 0xFF800000 : f32
    %17 = vector.broadcast %cst_7 : f32 to vector<1x64x64xf32>
    %18 = arith.select %16, %17, %2 : vector<1x64x64xi1>, vector<1x64x64xf32>
    %cst_8 = arith.constant dense<0xFF800000> : vector<1x64xf32>
    %19 = vector.multi_reduction <maximumf>, %18, %cst_8 [2] : vector<1x64x64xf32> to vector<1x64xf32>
    %20 = vector.shape_cast %19 : vector<1x64xf32> to vector<1x64x1xf32>
    %21 = vector.broadcast %20 : vector<1x64x1xf32> to vector<1x64x64xf32>
    %22 = arith.cmpf oeq, %18, %21 : vector<1x64x64xf32>
    %c64_i32_9 = arith.constant 64 : i32
    %23 = vector.shape_cast %3 : vector<1x1x64xi32> to vector<1x1x64xi32>
    %24 = vector.broadcast %23 : vector<1x1x64xi32> to vector<1x64x64xi32>
    %25 = vector.broadcast %c64_i32_9 : i32 to vector<1x64x64xi32>
    %26 = arith.select %22, %24, %25 : vector<1x64x64xi1>, vector<1x64x64xi32>
    %cst_10 = arith.constant dense<2147483647> : vector<1x64xi32>
    %27 = vector.multi_reduction <minsi>, %26, %cst_10 [2] : vector<1x64x64xi32> to vector<1x64xi32>
    %28 = vector.shape_cast %27 : vector<1x64xi32> to vector<1x64x1xi32>
    %29 = vector.broadcast %3 : vector<1x1x64xi32> to vector<1x64x64xi32>
    %30 = vector.broadcast %28 : vector<1x64x1xi32> to vector<1x64x64xi32>
    %31 = arith.cmpi eq, %29, %30 : vector<1x64x64xi32>
    %cst_11 = arith.constant 0xFF800000 : f32
    %32 = vector.broadcast %cst_11 : f32 to vector<1x64x64xf32>
    %33 = arith.select %31, %32, %18 : vector<1x64x64xi1>, vector<1x64x64xf32>
    %cst_12 = arith.constant dense<0xFF800000> : vector<1x64xf32>
    %34 = vector.multi_reduction <maximumf>, %33, %cst_12 [2] : vector<1x64x64xf32> to vector<1x64xf32>
    %35 = vector.shape_cast %34 : vector<1x64xf32> to vector<1x64x1xf32>
    %36 = vector.broadcast %35 : vector<1x64x1xf32> to vector<1x64x64xf32>
    %37 = arith.cmpf oeq, %33, %36 : vector<1x64x64xf32>
    %c64_i32_13 = arith.constant 64 : i32
    %38 = vector.shape_cast %3 : vector<1x1x64xi32> to vector<1x1x64xi32>
    %39 = vector.broadcast %38 : vector<1x1x64xi32> to vector<1x64x64xi32>
    %40 = vector.broadcast %c64_i32_13 : i32 to vector<1x64x64xi32>
    %41 = arith.select %37, %39, %40 : vector<1x64x64xi1>, vector<1x64x64xi32>
    %cst_14 = arith.constant dense<2147483647> : vector<1x64xi32>
    %42 = vector.multi_reduction <minsi>, %41, %cst_14 [2] : vector<1x64x64xi32> to vector<1x64xi32>
    %43 = vector.shape_cast %42 : vector<1x64xi32> to vector<1x64x1xi32>
    %44 = vector.broadcast %3 : vector<1x1x64xi32> to vector<1x64x64xi32>
    %45 = vector.broadcast %43 : vector<1x64x1xi32> to vector<1x64x64xi32>
    %46 = arith.cmpi eq, %44, %45 : vector<1x64x64xi32>
    %cst_15 = arith.constant 0xFF800000 : f32
    %47 = vector.broadcast %cst_15 : f32 to vector<1x64x64xf32>
    %48 = arith.select %46, %47, %33 : vector<1x64x64xi1>, vector<1x64x64xf32>
    %cst_16 = arith.constant dense<0xFF800000> : vector<1x64xf32>
    %49 = vector.multi_reduction <maximumf>, %48, %cst_16 [2] : vector<1x64x64xf32> to vector<1x64xf32>
    %50 = vector.shape_cast %49 : vector<1x64xf32> to vector<1x64x1xf32>
    %51 = vector.broadcast %50 : vector<1x64x1xf32> to vector<1x64x64xf32>
    %52 = arith.cmpf oeq, %48, %51 : vector<1x64x64xf32>
    %c64_i32_17 = arith.constant 64 : i32
    %53 = vector.shape_cast %3 : vector<1x1x64xi32> to vector<1x1x64xi32>
    %54 = vector.broadcast %53 : vector<1x1x64xi32> to vector<1x64x64xi32>
    %55 = vector.broadcast %c64_i32_17 : i32 to vector<1x64x64xi32>
    %56 = arith.select %52, %54, %55 : vector<1x64x64xi1>, vector<1x64x64xi32>
    %cst_18 = arith.constant dense<2147483647> : vector<1x64xi32>
    %57 = vector.multi_reduction <minsi>, %56, %cst_18 [2] : vector<1x64x64xi32> to vector<1x64xi32>
    %58 = vector.shape_cast %57 : vector<1x64xi32> to vector<1x64x1xi32>
    %cst_19 = arith.constant 0.176776692 : f32
    %59 = vector.broadcast %cst_19 : f32 to vector<1x64x1xf32>
    %60 = arith.mulf %5, %59 : vector<1x64x1xf32>
    %cst_20 = arith.constant 0.176776692 : f32
    %61 = vector.broadcast %cst_20 : f32 to vector<1x64x1xf32>
    %62 = arith.mulf %20, %61 : vector<1x64x1xf32>
    %cst_21 = arith.constant 0.176776692 : f32
    %63 = vector.broadcast %cst_21 : f32 to vector<1x64x1xf32>
    %64 = arith.mulf %35, %63 : vector<1x64x1xf32>
    %cst_22 = arith.constant 0.176776692 : f32
    %65 = vector.broadcast %cst_22 : f32 to vector<1x64x1xf32>
    %66 = arith.mulf %50, %65 : vector<1x64x1xf32>
    %67 = arith.subf %60, %60 : vector<1x64x1xf32>
    %68 = math.exp %67 : vector<1x64x1xf32>
    %69 = arith.subf %62, %60 : vector<1x64x1xf32>
    %70 = math.exp %69 : vector<1x64x1xf32>
    %71 = arith.subf %64, %60 : vector<1x64x1xf32>
    %72 = math.exp %71 : vector<1x64x1xf32>
    %73 = arith.subf %66, %60 : vector<1x64x1xf32>
    %74 = math.exp %73 : vector<1x64x1xf32>
    %75 = arith.addf %68, %70 : vector<1x64x1xf32>
    %76 = arith.addf %75, %72 : vector<1x64x1xf32>
    %77 = arith.addf %76, %74 : vector<1x64x1xf32>
    %cst_23 = arith.constant 1.000000e+00 : f32
    %78 = vector.broadcast %cst_23 : f32 to vector<1x64x1xf32>
    %79 = arith.divf %78, %77 : vector<1x64x1xf32>
    %80 = tpu.concatenate %68, %70, %72, %74 in 2 : vector<1x64x1xf32>, vector<1x64x1xf32>, vector<1x64x1xf32>, vector<1x64x1xf32> -> vector<1x64x4xf32>
    %81 = vector.broadcast %79 : vector<1x64x1xf32> to vector<1x64x4xf32>
    %82 = arith.mulf %80, %81 : vector<1x64x4xf32>
    %c0_24 = arith.constant 0 : index
    %c0_25 = arith.constant 0 : index
    %c0_26 = arith.constant 0 : index
    %83 = vector.load %arg4[%c0_24, %c0_25, %c0_26] : memref<1x64x4xf32, #tpu.memory_space<vmem>>, vector<1x64x4xf32>
    tpu.vector_store %arg4[%c0_24, %c0_25, %c0_26], %82 {strides = array<i32>} : memref<1x64x4xf32, #tpu.memory_space<vmem>>, vector<1x64x4xf32>,
    %84 = tpu.concatenate %13, %28, %43, %58 in 2 : vector<1x64x1xi32>, vector<1x64x1xi32>, vector<1x64x1xi32>, vector<1x64x1xi32> -> vector<1x64x4xi32>
    %c0_27 = arith.constant 0 : index
    %c0_28 = arith.constant 0 : index
    %c0_29 = arith.constant 0 : index
    %85 = vector.load %arg5[%c0_27, %c0_28, %c0_29] : memref<1x64x4xi32, #tpu.memory_space<vmem>>, vector<1x64x4xi32>
    tpu.vector_store %arg5[%c0_27, %c0_28, %c0_29], %84 {strides = array<i32>} : memref<1x64x4xi32, #tpu.memory_space<vmem>>, vector<1x64x4xi32>,
    return
  }
  func.func @transform_0(%arg0: i32, %arg1: i32) -> (i32, i32, i32) {
    %c0_i32 = arith.constant 0 : i32
    %c0_i32_0 = arith.constant 0 : i32
    return %arg0, %arg1, %c0_i32 : i32, i32, i32
  }
  func.func @transform_1(%arg0: i32, %arg1: i32) -> (i32, i32, i32) {
    %c0_i32 = arith.constant 0 : i32
    %c0_i32_0 = arith.constant 0 : i32
    %c0_i32_1 = arith.constant 0 : i32
    return %arg0, %c0_i32, %c0_i32_0 : i32, i32, i32
  }
  func.func @transform_2(%arg0: i32, %arg1: i32) -> (i32, i32, i32) {
    %c0_i32 = arith.constant 0 : i32
    %c0_i32_0 = arith.constant 0 : i32
    return %arg0, %arg1, %c0_i32 : i32, i32, i32
  }
  func.func @transform_3(%arg0: i32, %arg1: i32) -> (i32, i32, i32) {
    %c0_i32 = arith.constant 0 : i32
    %c0_i32_0 = arith.constant 0 : i32
    return %arg0, %arg1, %c0_i32 : i32, i32, i32
  }
}

</mosaic_0001>

<llo_original>
// kernel: tpu_custom_call.1
$region0: #{tpu_custom_call.1}
  #allocation0 [shape = 'u32[]', space=smem, size = 0x4, offset = 0x4, fixed_abs, tag = 'smem constant byte address 0x4 - core index']
  #allocation1 [shape = 'u32[144,128]{1,0:T(1,128)}', space=vmem, size = 0x12000, scoped, tag = 'internal scratch']
  %s0 = inlined_call_operand.vmem [shape: f32[2,64,32], index: 0, kind: input, shape index: {}]
  %s1 = inlined_call_operand.vmem [shape: f32[2,64,32], index: 1, kind: input, shape index: {}]
  %s2 = inlined_call_operand.vmem [shape: f32[2,64,4], index: 2, kind: output, shape index: {0}]
  %s3 = inlined_call_operand.vmem [shape: s32[2,64,4], index: 3, kind: output, shape index: {1}]
  %4 = xla_tuple %s2, %s3
  %s5 = sld [smem:[#allocation0]]
  $region49: #{tpu_custom_call.1} parent=0
    _
  %s7 = ssub.s32 1, %s5
  %s8 = scalar_select 0, %s7, %s5
  loop: start=0, step=1, limit=4
  $region2: #{tpu_custom_call.1} parent=0 // loop_pre_header
    _
  $region3: #{tpu_custom_call.1} parent=0 // loop_header
    %s10 = sphi 0, %s14
    %p11 = scmp.ge.s32.totalorder %s10, 4
    %s17 = sphi 0, %s29
    %s18 = sphi 0, %s25
    %s19 = sphi 0, %s17
    %s20 = sphi 0, %s18
    %s21 = sphi 0, %s19
    %s22 = sphi 0, %s20
    %s34 = sphi 0, %s36
    %s37 = sphi 0, %s34
    %s38 = sphi 0, %s37
    %s54 = sphi 0, %s38
    %s60 = sphi 0, %s62
    %s63 = sphi 0, %s60
    %s64 = sphi 0, %s63
    %s80 = sphi 0, %s64
    %s88 = sphi 0, %s90
    %s91 = sphi 0, %s88
    %s92 = sphi 0, %s91
    %s108 = sphi 0, %s92
    %s116 = sphi 0, %s118
    %s119 = sphi 0, %s116
    %s120 = sphi 0, %s119
    %s136 = sphi 0, %s120
  $region4: #{tpu_custom_call.1} parent=0 // loop_header_branch
    %13 = sbr.rel (%p11) target = $region8
  $region5: #{tpu_custom_call.1} parent=0 // loop_body
    %s15 = ssub.s32 %s10, 1
    %s16 = ssub.s32 %s10, 2
    %s23 = sadd.s32 1, %s18
    %p24 = scmp.ge.s32.totalorder %s23, 1
    %s25 = scalar_select %p24, 0, %s23
    %s26 = sadd.s32 1, %s17
    %s27 = scalar_select %p24, %s26, %s17
    %p28 = scmp.ge.s32.totalorder %s27, 2
    %s29 = scalar_select %p28, 0, %s27
    %s30 = ssub.s32 %s17, %s29
    %s31 = ssub.s32 %s18, %s25
    %s32 = sor.u32 %s30, %s31
    %p33 = scmp.eq.s32.totalorder %s32, 0
    %s35 = sadd.s32 %s34, 1
    %s36 = scalar_select %p33, %s34, %s35
    %p39 = pneg %p33
    %p40 = scmp.eq.s32.totalorder %s10, 1
    %p41 = por %p39, %p40
    %p42 = scmp.ne.s32.totalorder %s34, %s37
    %p43 = scmp.eq.s32.totalorder %s10, 0
    %p44 = por %p42, %p43
    %p45 = scmp.ne.s32.totalorder %s34, %s37
    %p46 = scmp.eq.s32.totalorder %s15, 1
    %p47 = por %p45, %p46
    %p48 = scmp.ne.s32.totalorder %s37, %s38
    %p49 = scmp.eq.s32.totalorder %s15, 0
    %p50 = por %p48, %p49
    %p51 = scmp.ne.s32.totalorder %s37, %s38
    %p52 = scmp.eq.s32.totalorder %s16, 1
    %p53 = por %p51, %p52
    %p55 = scmp.ne.s32.totalorder %s38, %s54
    %p56 = scmp.eq.s32.totalorder %s16, 0
    %p57 = por %p55, %p56
    %s58 = ssub.s32 %s17, %s29
    %p59 = scmp.eq.s32.totalorder %s58, 0
    %s61 = sadd.s32 %s60, 1
    %s62 = scalar_select %p59, %s60, %s61
    %p65 = pneg %p59
    %p66 = scmp.eq.s32.totalorder %s10, 1
    %p67 = por %p65, %p66
    %p68 = scmp.ne.s32.totalorder %s60, %s63
    %p69 = scmp.eq.s32.totalorder %s10, 0
    %p70 = por %p68, %p69
    %p71 = scmp.ne.s32.totalorder %s60, %s63
    %p72 = scmp.eq.s32.totalorder %s15, 1
    %p73 = por %p71, %p72
    %p74 = scmp.ne.s32.totalorder %s63, %s64
    %p75 = scmp.eq.s32.totalorder %s15, 0
    %p76 = por %p74, %p75
    %p77 = scmp.ne.s32.totalorder %s63, %s64
    %p78 = scmp.eq.s32.totalorder %s16, 1
    %p79 = por %p77, %p78
    %p81 = scmp.ne.s32.totalorder %s64, %s80
    %p82 = scmp.eq.s32.totalorder %s16, 0
    %p83 = por %p81, %p82
    %s84 = ssub.s32 %s17, %s29
    %s85 = ssub.s32 %s18, %s25
    %s86 = sor.u32 %s84, %s85
    %p87 = scmp.eq.s32.totalorder %s86, 0
    %s89 = sadd.s32 %s88, 1
    %s90 = scalar_select %p87, %s88, %s89
    %p93 = pneg %p87
    %p94 = scmp.eq.s32.totalorder %s10, 1
    %p95 = por %p93, %p94
    %p96 = scmp.ne.s32.totalorder %s88, %s91
    %p97 = scmp.eq.s32.totalorder %s10, 0
    %p98 = por %p96, %p97
    %p99 = scmp.ne.s32.totalorder %s88, %s91
    %p100 = scmp.eq.s32.totalorder %s15, 1
    %p101 = por %p99, %p100
    %p102 = scmp.ne.s32.totalorder %s91, %s92
    %p103 = scmp.eq.s32.totalorder %s15, 0
    %p104 = por %p102, %p103
    %p105 = scmp.ne.s32.totalorder %s91, %s92
    %p106 = scmp.eq.s32.totalorder %s16, 1
    %p107 = por %p105, %p106
    %p109 = scmp.ne.s32.totalorder %s92, %s108
    %p110 = scmp.eq.s32.totalorder %s16, 0
    %p111 = por %p109, %p110
    %s112 = ssub.s32 %s17, %s29
    %s113 = ssub.s32 %s18, %s25
    %s114 = sor.u32 %s112, %s113
    %p115 = scmp.eq.s32.totalorder %s114, 0
    %s117 = sadd.s32 %s116, 1
    %s118 = scalar_select %p115, %s116, %s117
    %p121 = pneg %p115
    %p122 = scmp.eq.s32.totalorder %s10, 1
    %p123 = por %p121, %p122
    %p124 = scmp.ne.s32.totalorder %s116, %s119
    %p125 = scmp.eq.s32.totalorder %s10, 0
    %p126 = por %p124, %p125
    %p127 = scmp.ne.s32.totalorder %s116, %s119
    %p128 = scmp.eq.s32.totalorder %s15, 1
    %p129 = por %p127, %p128
    %p130 = scmp.ne.s32.totalorder %s119, %s120
    %p131 = scmp.eq.s32.totalorder %s15, 0
    %p132 = por %p130, %p131
    %p133 = scmp.ne.s32.totalorder %s119, %s120
    %p134 = scmp.eq.s32.totalorder %s16, 1
    %p135 = por %p133, %p134
    %p137 = scmp.ne.s32.totalorder %s120, %s136
    %p138 = scmp.eq.s32.totalorder %s16, 0
    %p139 = por %p137, %p138
    %p140 = scmp.le.s32.totalorder 1, %s10
    %p141 = scmp.lt.s32.totalorder %s10, 3
    %p142 = pnand %p140, %p141
    %p143 = pneg %p142
    // Predicated region
    $region9: #{tpu_custom_call.1} parent=5 // pred_check
      _
    $region10: #{tpu_custom_call.1} parent=5 // pred_check_branch
      %145 = sbr.rel (%p142) target = $region12
    $region11: #{tpu_custom_call.1} parent=5 // pred_region
      %s146 = ssub.s32 %s10, 1
    $region12: #{tpu_custom_call.1} parent=5 // pred_fallthru
      _
    %p147 = scmp.lt.s32.totalorder %s10, 2
    // Predicated region
    $region13: #{tpu_custom_call.1} parent=5 // pred_check
      %p148 = pneg %p147
    $region14: #{tpu_custom_call.1} parent=5 // pred_check_branch
      %150 = sbr.rel (%p148) target = $region16
    $region15: #{tpu_custom_call.1} parent=5 // pred_region
      // Predicated region
      $region17: #{tpu_custom_call.1} parent=15 // pred_check
        %p151 = pneg %p44
      $region18: #{tpu_custom_call.1} parent=15 // pred_check_branch
        %153 = sbr.rel (%p151) target = $region20
      $region19: #{tpu_custom_call.1} parent=15 // pred_region
        %s154 = smul.u32 8, %s18
        %p155 = scmp.lt.s32.totalorder %s17, 1
        %s156 = scalar_select %p155, %s17, 1
        %p157 = scmp.lt.s32.totalorder %s154, 7
        %s158 = scalar_select %p157, %s154, 7
        %s159 = smul.addr %s156, 8
        %s160 = sadd.s32 %s158, %s159
        %s161 = smul.addr %s160, 8
        %s162 = scalar_lea.vmem %s0, %s161
        %s163 = smul.u32 8, %s18
      $region20: #{tpu_custom_call.1} parent=15 // pred_fallthru
        _
      // Predicated region
      $region21: #{tpu_custom_call.1} parent=15 // pred_check
        %p164 = pneg %p70
      $region22: #{tpu_custom_call.1} parent=15 // pred_check_branch
        %166 = sbr.rel (%p164) target = $region24
      $region23: #{tpu_custom_call.1} parent=15 // pred_region
        %p167 = scmp.lt.s32.totalorder %s17, 1
        %s168 = scalar_select %p167, %s17, 1
        %s169 = smul.addr %s168, 8
        %s170 = smul.addr %s169, 8
        %s171 = scalar_lea.vmem %s1, %s170
      $region24: #{tpu_custom_call.1} parent=15 // pred_fallthru
        _
    $region16: #{tpu_custom_call.1} parent=5 // pred_fallthru
      _
    %p172 = scmp.le.s32.totalorder 1, %s10
    %p173 = scmp.lt.s32.totalorder %s10, 3
    %p174 = pnand %p172, %p173
    %p175 = pneg %p174
    // Predicated region
    $region25: #{tpu_custom_call.1} parent=5 // pred_check
      _
    $region26: #{tpu_custom_call.1} parent=5 // pred_check_branch
      %177 = sbr.rel (%p174) target = $region28
    $region27: #{tpu_custom_call.1} parent=5 // pred_region
      %s178 = ssub.s32 %s10, 1
      %s179 = smul.u32 8, %s20
      %p180 = scmp.lt.s32.totalorder %s19, 1
      %s181 = scalar_select %p180, %s19, 1
      %p182 = scmp.lt.s32.totalorder %s179, 7
      %s183 = scalar_select %p182, %s179, 7
      %s184 = smul.addr %s181, 8
      %s185 = sadd.s32 %s183, %s184
      %s186 = smul.addr %s185, 8
      %s187 = scalar_lea.vmem %s0, %s186
      %p188 = pneg %p50
      %p189 = pneg %p47
      %p190 = scmp.lt.s32.totalorder %s19, 1
      %s191 = scalar_select %p190, %s19, 1
      %s192 = smul.addr %s191, 8
      %s193 = smul.addr %s192, 8
      %s194 = scalar_lea.vmem %s1, %s193
      %p195 = pneg %p76
      %p196 = pneg %p73
      %p197 = pneg %p104
      %p198 = pneg %p101
      %s199 = smul.u32 8, %s20
      %p200 = scmp.lt.s32.totalorder %s19, 1
      %s201 = scalar_select %p200, %s19, 1
      %p202 = scmp.lt.s32.totalorder %s199, 7
      %s203 = scalar_select %p202, %s199, 7
      %s204 = smul.addr %s201, 8
      %s205 = sadd.s32 %s203, %s204
      %s206 = smul.addr %s205, 8
      %s207 = scalar_lea.vmem %s2, %s206
      %p208 = pneg %p132
      %p209 = pneg %p129
      %s210 = smul.u32 8, %s20
      %p211 = scmp.lt.s32.totalorder %s19, 1
      %s212 = scalar_select %p211, %s19, 1
      %p213 = scmp.lt.s32.totalorder %s210, 7
      %s214 = scalar_select %p213, %s210, 7
      %s215 = smul.addr %s212, 8
      %s216 = sadd.s32 %s214, %s215
      %s217 = smul.addr %s216, 8
      %s218 = scalar_lea.vmem %s3, %s217
      %s219 = smul.u32 8, %s20
      %p220 = scmp.lt.s32.totalorder %s19, 1
      %s221 = scalar_select %p220, %s19, 1
      %p222 = scmp.lt.s32.totalorder %s219, 7
      %s223 = scalar_select %p222, %s219, 7
      %s224 = smul.addr %s221, 8
      %s225 = sadd.s32 %s223, %s224
      %s226 = smul.addr %s225, 8
      %s227 = scalar_lea.vmem %s0, %s226
      %s228 = smul.u32 8, %s20
      %p229 = scmp.lt.s32.totalorder %s19, 1
      %s230 = scalar_select %p229, %s19, 1
      %s231 = smul.addr %s230, 8
      %s232 = smul.addr %s231, 8
      %s233 = scalar_lea.vmem %s1, %s232
      %s234 = smul.u32 8, %s20
      %p235 = scmp.lt.s32.totalorder %s19, 1
      %s236 = scalar_select %p235, %s19, 1
      %p237 = scmp.lt.s32.totalorder %s234, 7
      %s238 = scalar_select %p237, %s234, 7
      %s239 = smul.addr %s236, 8
      %s240 = sadd.s32 %s238, %s239
      %s241 = smul.addr %s240, 8
      %s242 = scalar_lea.vmem %s2, %s241
      %s243 = smul.u32 8, %s20
      %s244 = smul.u32 8, %s20
      %p245 = scmp.lt.s32.totalorder %s19, 1
      %s246 = scalar_select %p245, %s19, 1
      %p247 = scmp.lt.s32.totalorder %s244, 7
      %s248 = scalar_select %p247, %s244, 7
      %s249 = smul.addr %s246, 8
      %s250 = sadd.s32 %s248, %s249
      %s251 = smul.addr %s250, 8
      %s252 = scalar_lea.vmem %s3, %s251
      %s253 = smul.u32 8, %s20
      %v254 = vld [vmem:[%s227] sm:$0xff]
      %v255 = vld [vmem:[%s227 + $0x8] sm:$0xff]
      %v256 = vld [vmem:[%s227 + $0x10] sm:$0xff]
      %v257 = vld [vmem:[%s227 + $0x18] sm:$0xff]
      %v258 = vld [vmem:[%s227 + $0x20] sm:$0xff]
      %v259 = vld [vmem:[%s227 + $0x28] sm:$0xff]
      %v260 = vld [vmem:[%s227 + $0x30] sm:$0xff]
      %v261 = vld [vmem:[%s227 + $0x38] sm:$0xff]
      %v262 = vld [vmem:[%s233] sm:$0xff]
      %v263 = vld [vmem:[%s233 + $0x8] sm:$0xff]
      %v264 = vld [vmem:[%s233 + $0x10] sm:$0xff]
      %v265 = vld [vmem:[%s233 + $0x18] sm:$0xff]
      %v266 = vld [vmem:[%s233 + $0x20] sm:$0xff]
      %v267 = vld [vmem:[%s233 + $0x28] sm:$0xff]
      %v268 = vld [vmem:[%s233 + $0x30] sm:$0xff]
      %v269 = vld [vmem:[%s233 + $0x38] sm:$0xff]
      %vm270 = vcmask 261120
      %v272 = vsel %vm270, %v254, 0
      %v275 = vsel %vm270, %v255, 0
      %v278 = vsel %vm270, %v256, 0
      %v281 = vsel %vm270, %v257, 0
      %v284 = vsel %vm270, %v258, 0
      %v287 = vsel %vm270, %v259, 0
      %v290 = vsel %vm270, %v260, 0
      %v293 = vsel %vm270, %v261, 0
      %v296 = vsel %vm270, %v262, 0
      %v299 = vsel %vm270, %v263, 0
      %v302 = vsel %vm270, %v264, 0
      %v305 = vsel %vm270, %v265, 0
      %v308 = vsel %vm270, %v266, 0
      %v311 = vsel %vm270, %v267, 0
      %v314 = vsel %vm270, %v268, 0
      %v317 = vsel %vm270, %v269, 0
      %319 = vmatprep.subr.mxu0 0.0
      %320 = vmatpush1.xpose.msra.mxu0 0.0
      %321 = vmatprep.subr.mxu0 0.0
      %322 = vmatpush1.xpose.msra.mxu0 0.0
      %323 = vmatprep.subr.mxu0 0.0
      %324 = vmatpush1.xpose.msra.mxu0 0.0
      %325 = vmatprep.subr.mxu0 0.0
      %326 = vmatpush1.xpose.msra.mxu0 0.0
      %327 = vmatprep.subr.mxu0 0.0
      %328 = vmatpush1.xpose.msra.mxu0 0.0
      %329 = vmatprep.subr.mxu0 0.0
      %330 = vmatpush1.xpose.msra.mxu0 0.0
      %331 = vmatprep.subr.mxu0 0.0
      %332 = vmatpush1.xpose.msra.mxu0 0.0
      %333 = vmatprep.subr.mxu0 0.0
      %334 = vmatpush1.xpose.msra.mxu0 0.0
      %335 = vmatprep.subr.mxu0 0.0
      %336 = vmatpush1.xpose.msra.mxu0 %v317
      %337 = vmatprep.subr.mxu0 0.0
      %338 = vmatpush1.xpose.msra.mxu0 %v314
      %339 = vmatprep.subr.mxu0 0.0
      %340 = vmatpush1.xpose.msra.mxu0 %v311
      %341 = vmatprep.subr.mxu0 0.0
      %342 = vmatpush1.xpose.msra.mxu0 %v308
      %343 = vmatprep.subr.mxu0 0.0
      %344 = vmatpush1.xpose.msra.mxu0 %v305
      %345 = vmatprep.subr.mxu0 0.0
      %346 = vmatpush1.xpose.msra.mxu0 %v302
      %347 = vmatprep.subr.mxu0 0.0
      %348 = vmatpush1.xpose.msra.mxu0 %v299
      %349 = vmatprep.subr.mxu0 0.0
      %350 = vmatpush1.xpose.msra.mxu0 %v296
      %351 = vmatprep.subr.mxu0 0.0
      %352 = vmatpush2.xpose.msra.mxu0 0.0
      %353 = vmatprep.subr.mxu0 0.0
      %354 = vmatpush2.xpose.msra.mxu0 0.0
      %355 = vmatprep.subr.mxu0 0.0
      %356 = vmatpush2.xpose.msra.mxu0 0.0
      %357 = vmatprep.subr.mxu0 0.0
      %358 = vmatpush2.xpose.msra.mxu0 0.0
      %359 = vmatprep.subr.mxu0 0.0
      %360 = vmatpush2.xpose.msra.mxu0 0.0
      %361 = vmatprep.subr.mxu0 0.0
      %362 = vmatpush2.xpose.msra.mxu0 0.0
      %363 = vmatprep.subr.mxu0 0.0
      %364 = vmatpush2.xpose.msra.mxu0 0.0
      %365 = vmatprep.subr.mxu0 0.0
      %366 = vmatpush2.xpose.msra.mxu0 0.0
      %367 = vmatprep.subr.mxu0 0.0
      %368 = vmatpush2.xpose.msra.mxu0 0.0
      %369 = vmatprep.subr.mxu0 0.0
      %370 = vmatpush2.xpose.msra.mxu0 0.0
      %371 = vmatprep.subr.mxu0 0.0
      %372 = vmatpush2.xpose.msra.mxu0 0.0
      %373 = vmatprep.subr.mxu0 0.0
      %374 = vmatpush2.xpose.msra.mxu0 0.0
      %375 = vmatprep.subr.mxu0 0.0
      %376 = vmatpush2.xpose.msra.mxu0 0.0
      %377 = vmatprep.subr.mxu0 0.0
      %378 = vmatpush2.xpose.msra.mxu0 0.0
      %379 = vmatprep.subr.mxu0 0.0
      %380 = vmatpush2.xpose.msra.mxu0 0.0
      %381 = vmatprep.subr.mxu0 0.0
      %382 = vmatpush2.xpose.msra.mxu0 0.0
      %383 = vmatprep.mubr.f32.mxu0 0.0
      %384 = vmatmul.mubr.f32.gmra.mxu0 %v272
      %v385 = vpop.f32.mrf.mxu0
      %v386 = vadd.f32 0.0, %v385
      %v387 = vpop.f32.mrf.mxu0
      %388 = vmatprep.mubr.f32.mxu0 0.0
      %389 = vmatmul.mubr.f32.gmra.mxu0 %v275
      %v390 = vpop.f32.mrf.mxu0
      %v391 = vadd.f32 0.0, %v390
      %v392 = vpop.f32.mrf.mxu0
      %393 = vmatprep.mubr.f32.mxu0 0.0
      %394 = vmatmul.mubr.f32.gmra.mxu0 %v278
      %v395 = vpop.f32.mrf.mxu0
      %v396 = vadd.f32 0.0, %v395
      %v397 = vpop.f32.mrf.mxu0
      %398 = vmatprep.mubr.f32.mxu0 0.0
      %399 = vmatmul.mubr.f32.gmra.mxu0 %v281
      %v400 = vpop.f32.mrf.mxu0
      %v401 = vadd.f32 0.0, %v400
      %v402 = vpop.f32.mrf.mxu0
      %403 = vmatprep.mubr.f32.mxu0 0.0
      %404 = vmatmul.mubr.f32.gmra.mxu0 %v284
      %v405 = vpop.f32.mrf.mxu0
      %v406 = vadd.f32 0.0, %v405
      %v407 = vpop.f32.mrf.mxu0
      %408 = vmatprep.mubr.f32.mxu0 0.0
      %409 = vmatmul.mubr.f32.gmra.mxu0 %v287
      %v410 = vpop.f32.mrf.mxu0
      %v411 = vadd.f32 0.0, %v410
      %v412 = vpop.f32.mrf.mxu0
      %413 = vmatprep.mubr.f32.mxu0 0.0
      %414 = vmatmul.mubr.f32.gmra.mxu0 %v290
      %v415 = vpop.f32.mrf.mxu0
      %v416 = vadd.f32 0.0, %v415
      %v417 = vpop.f32.mrf.mxu0
      %418 = vmatprep.mubr.f32.mxu0 0.0
      %419 = vmatmul.mubr.f32.gmra.mxu0 %v293
      %v420 = vpop.f32.mrf.mxu0
      %v421 = vadd.f32 0.0, %v420
      %v422 = vpop.f32.mrf.mxu0
      %423 = vdwg.mxu0
      %v424 = vlaneseq
      %v425 = vand.u32 %v424, 127
      %vm426 = vcmask 523264
      %v427 = vsel %vm426, %v386, -inf
      %428 = vmax.xlane.f32.xlu0 %v427
      %v429 = vpop.xlane.xlu0 %428
      %v430 = vsel %vm426, %v391, -inf
      %431 = vmax.xlane.f32.xlu0 %v430
      %v432 = vpop.xlane.xlu0 %431
      %v433 = vsel %vm426, %v396, -inf
      %434 = vmax.xlane.f32.xlu0 %v433
      %v435 = vpop.xlane.xlu0 %434
      %v436 = vsel %vm426, %v401, -inf
      %437 = vmax.xlane.f32.xlu0 %v436
      %v438 = vpop.xlane.xlu0 %437
      %v439 = vsel %vm426, %v406, -inf
      %440 = vmax.xlane.f32.xlu0 %v439
      %v441 = vpop.xlane.xlu0 %440
      %v442 = vsel %vm426, %v411, -inf
      %443 = vmax.xlane.f32.xlu0 %v442
      %v444 = vpop.xlane.xlu0 %443
      %v445 = vsel %vm426, %v416, -inf
      %446 = vmax.xlane.f32.xlu0 %v445
      %v447 = vpop.xlane.xlu0 %446
      %v448 = vsel %vm426, %v421, -inf
      %449 = vmax.xlane.f32.xlu0 %v448
      %v450 = vpop.xlane.xlu0 %449
      %vm451 = vcmp.eq.f32.partialorder %v386, %v429
      %vm452 = vcmp.eq.f32.partialorder %v391, %v432
      %vm453 = vcmp.eq.f32.partialorder %v396, %v435
      %vm454 = vcmp.eq.f32.partialorder %v401, %v438
      %vm455 = vcmp.eq.f32.partialorder %v406, %v441
      %vm456 = vcmp.eq.f32.partialorder %v411, %v444
      %vm457 = vcmp.eq.f32.partialorder %v416, %v447
      %vm458 = vcmp.eq.f32.partialorder %v421, %v450
      %v459 = vsel %vm451, %v425, 64
      %v460 = vsel %vm452, %v425, 64
      %v461 = vsel %vm453, %v425, 64
      %v462 = vsel %vm454, %v425, 64
      %v463 = vsel %vm455, %v425, 64
      %v464 = vsel %vm456, %v425, 64
      %v465 = vsel %vm457, %v425, 64
      %v466 = vsel %vm458, %v425, 64
      %v467 = vsel %vm426, %v459, 2147483647
      %v468 = vand.u32 %v467, 65535
      %v469 = vshra.s32 %v467, 16
      %v470 = vcvt.s32.f32 %v468
      %v471 = vcvt.s32.f32 %v469
      %472 = vmin.xlane.f32.xlu0 %v471
      %v473 = vpop.xlane.xlu0 %472
      %vm474 = vcmp.eq.f32.partialorder %v471, %v473
      %v475 = vsel %vm474, %v470, inf
      %476 = vmin.xlane.f32.xlu0 %v475
      %v477 = vpop.xlane.xlu0 %476
      %v478 = vcvt.f32.s32 %v477
      %v479 = vcvt.f32.s32 %v473
      %v480 = vshll.u32 %v479, 16
      %v481 = vadd.s32 %v480, %v478
      %v482 = vsel %vm426, %v460, 2147483647
      %v483 = vand.u32 %v482, 65535
      %v484 = vshra.s32 %v482, 16
      %v485 = vcvt.s32.f32 %v483
      %v486 = vcvt.s32.f32 %v484
      %487 = vmin.xlane.f32.xlu0 %v486
      %v488 = vpop.xlane.xlu0 %487
      %vm489 = vcmp.eq.f32.partialorder %v486, %v488
      %v490 = vsel %vm489, %v485, inf
      %491 = vmin.xlane.f32.xlu0 %v490
      %v492 = vpop.xlane.xlu0 %491
      %v493 = vcvt.f32.s32 %v492
      %v494 = vcvt.f32.s32 %v488
      %v495 = vshll.u32 %v494, 16
      %v496 = vadd.s32 %v495, %v493
      %v497 = vsel %vm426, %v461, 2147483647
      %v498 = vand.u32 %v497, 65535
      %v499 = vshra.s32 %v497, 16
      %v500 = vcvt.s32.f32 %v498
      %v501 = vcvt.s32.f32 %v499
      %502 = vmin.xlane.f32.xlu0 %v501
      %v503 = vpop.xlane.xlu0 %502
      %vm504 = vcmp.eq.f32.partialorder %v501, %v503
      %v505 = vsel %vm504, %v500, inf
      %506 = vmin.xlane.f32.xlu0 %v505
      %v507 = vpop.xlane.xlu0 %506
      %v508 = vcvt.f32.s32 %v507
      %v509 = vcvt.f32.s32 %v503
      %v510 = vshll.u32 %v509, 16
      %v511 = vadd.s32 %v510, %v508
      %v512 = vsel %vm426, %v462, 2147483647
      %v513 = vand.u32 %v512, 65535
      %v514 = vshra.s32 %v512, 16
      %v515 = vcvt.s32.f32 %v513
      %v516 = vcvt.s32.f32 %v514
      %517 = vmin.xlane.f32.xlu0 %v516
      %v518 = vpop.xlane.xlu0 %517
      %vm519 = vcmp.eq.f32.partialorder %v516, %v518
      %v520 = vsel %vm519, %v515, inf
      %521 = vmin.xlane.f32.xlu0 %v520
      %v522 = vpop.xlane.xlu0 %521
      %v523 = vcvt.f32.s32 %v522
      %v524 = vcvt.f32.s32 %v518
      %v525 = vshll.u32 %v524, 16
      %v526 = vadd.s32 %v525, %v523
      %v527 = vsel %vm426, %v463, 2147483647
      %v528 = vand.u32 %v527, 65535
      %v529 = vshra.s32 %v527, 16
      %v530 = vcvt.s32.f32 %v528
      %v531 = vcvt.s32.f32 %v529
      %532 = vmin.xlane.f32.xlu0 %v531
      %v533 = vpop.xlane.xlu0 %532
      %vm534 = vcmp.eq.f32.partialorder %v531, %v533
      %v535 = vsel %vm534, %v530, inf
      %536 = vmin.xlane.f32.xlu0 %v535
      %v537 = vpop.xlane.xlu0 %536
      %v538 = vcvt.f32.s32 %v537
      %v539 = vcvt.f32.s32 %v533
      %v540 = vshll.u32 %v539, 16
      %v541 = vadd.s32 %v540, %v538
      %v542 = vsel %vm426, %v464, 2147483647
      %v543 = vand.u32 %v542, 65535
      %v544 = vshra.s32 %v542, 16
      %v545 = vcvt.s32.f32 %v543
      %v546 = vcvt.s32.f32 %v544
      %547 = vmin.xlane.f32.xlu0 %v546
      %v548 = vpop.xlane.xlu0 %547
      %vm549 = vcmp.eq.f32.partialorder %v546, %v548
      %v550 = vsel %vm549, %v545, inf
      %551 = vmin.xlane.f32.xlu0 %v550
      %v552 = vpop.xlane.xlu0 %551
      %v553 = vcvt.f32.s32 %v552
      %v554 = vcvt.f32.s32 %v548
      %v555 = vshll.u32 %v554, 16
      %v556 = vadd.s32 %v555, %v553
      %v557 = vsel %vm426, %v465, 2147483647
      %v558 = vand.u32 %v557, 65535
      %v559 = vshra.s32 %v557, 16
      %v560 = vcvt.s32.f32 %v558
      %v561 = vcvt.s32.f32 %v559
      %562 = vmin.xlane.f32.xlu0 %v561
      %v563 = vpop.xlane.xlu0 %562
      %vm564 = vcmp.eq.f32.partialorder %v561, %v563
      %v565 = vsel %vm564, %v560, inf
      %566 = vmin.xlane.f32.xlu0 %v565
      %v567 = vpop.xlane.xlu0 %566
      %v568 = vcvt.f32.s32 %v567
      %v569 = vcvt.f32.s32 %v563
      %v570 = vshll.u32 %v569, 16
      %v571 = vadd.s32 %v570, %v568
      %v572 = vsel %vm426, %v466, 2147483647
      %v573 = vand.u32 %v572, 65535
      %v574 = vshra.s32 %v572, 16
      %v575 = vcvt.s32.f32 %v573
      %v576 = vcvt.s32.f32 %v574
      %577 = vmin.xlane.f32.xlu0 %v576
      %v578 = vpop.xlane.xlu0 %577
      %vm579 = vcmp.eq.f32.partialorder %v576, %v578
      %v580 = vsel %vm579, %v575, inf
      %581 = vmin.xlane.f32.xlu0 %v580
      %v582 = vpop.xlane.xlu0 %581
      %v583 = vcvt.f32.s32 %v582
      %v584 = vcvt.f32.s32 %v578
      %v585 = vshll.u32 %v584, 16
      %v586 = vadd.s32 %v585, %v583
      %vm587 = vcmp.eq.s32.totalorder %v425, %v481
      %vm588 = vcmp.eq.s32.totalorder %v425, %v496
      %vm589 = vcmp.eq.s32.totalorder %v425, %v511
      %vm590 = vcmp.eq.s32.totalorder %v425, %v526
      %vm591 = vcmp.eq.s32.totalorder %v425, %v541
      %vm592 = vcmp.eq.s32.totalorder %v425, %v556
      %vm593 = vcmp.eq.s32.totalorder %v425, %v571
      %vm594 = vcmp.eq.s32.totalorder %v425, %v586
      %v595 = vsel %vm587, -inf, %v386
      %v596 = vsel %vm588, -inf, %v391
      %v597 = vsel %vm589, -inf, %v396
      %v598 = vsel %vm590, -inf, %v401
      %v599 = vsel %vm591, -inf, %v406
      %v600 = vsel %vm592, -inf, %v411
      %v601 = vsel %vm593, -inf, %v416
      %v602 = vsel %vm594, -inf, %v421
      %v603 = vsel %vm426, %v595, -inf
      %604 = vmax.xlane.f32.xlu0 %v603
      %v605 = vpop.xlane.xlu0 %604
      %v606 = vsel %vm426, %v596, -inf
      %607 = vmax.xlane.f32.xlu0 %v606
      %v608 = vpop.xlane.xlu0 %607
      %v609 = vsel %vm426, %v597, -inf
      %610 = vmax.xlane.f32.xlu0 %v609
      %v611 = vpop.xlane.xlu0 %610
      %v612 = vsel %vm426, %v598, -inf
      %613 = vmax.xlane.f32.xlu0 %v612
      %v614 = vpop.xlane.xlu0 %613
      %v615 = vsel %vm426, %v599, -inf
      %616 = vmax.xlane.f32.xlu0 %v615
      %v617 = vpop.xlane.xlu0 %616
      %v618 = vsel %vm426, %v600, -inf
      %619 = vmax.xlane.f32.xlu0 %v618
      %v620 = vpop.xlane.xlu0 %619
      %v621 = vsel %vm426, %v601, -inf
      %622 = vmax.xlane.f32.xlu0 %v621
      %v623 = vpop.xlane.xlu0 %622
      %v624 = vsel %vm426, %v602, -inf
      %625 = vmax.xlane.f32.xlu0 %v624
      %v626 = vpop.xlane.xlu0 %625
      %vm627 = vcmp.eq.f32.partialorder %v595, %v605
      %vm628 = vcmp.eq.f32.partialorder %v596, %v608
      %vm629 = vcmp.eq.f32.partialorder %v597, %v611
      %vm630 = vcmp.eq.f32.partialorder %v598, %v614
      %vm631 = vcmp.eq.f32.partialorder %v599, %v617
      %vm632 = vcmp.eq.f32.partialorder %v600, %v620
      %vm633 = vcmp.eq.f32.partialorder %v601, %v623
      %vm634 = vcmp.eq.f32.partialorder %v602, %v626
      %v635 = vsel %vm627, %v425, 64
      %v636 = vsel %vm628, %v425, 64
      %v637 = vsel %vm629, %v425, 64
      %v638 = vsel %vm630, %v425, 64
      %v639 = vsel %vm631, %v425, 64
      %v640 = vsel %vm632, %v425, 64
      %v641 = vsel %vm633, %v425, 64
      %v642 = vsel %vm634, %v425, 64
      %v643 = vsel %vm426, %v635, 2147483647
      %v644 = vand.u32 %v643, 65535
      %v645 = vshra.s32 %v643, 16
      %v646 = vcvt.s32.f32 %v644
      %v647 = vcvt.s32.f32 %v645
      %648 = vmin.xlane.f32.xlu0 %v647
      %v649 = vpop.xlane.xlu0 %648
      %vm650 = vcmp.eq.f32.partialorder %v647, %v649
      %v651 = vsel %vm650, %v646, inf
      %652 = vmin.xlane.f32.xlu0 %v651
      %v653 = vpop.xlane.xlu0 %652
      %v654 = vcvt.f32.s32 %v653
      %v655 = vcvt.f32.s32 %v649
      %v656 = vshll.u32 %v655, 16
      %v657 = vadd.s32 %v656, %v654
      %v658 = vsel %vm426, %v636, 2147483647
      %v659 = vand.u32 %v658, 65535
      %v660 = vshra.s32 %v658, 16
      %v661 = vcvt.s32.f32 %v659
      %v662 = vcvt.s32.f32 %v660
      %663 = vmin.xlane.f32.xlu0 %v662
      %v664 = vpop.xlane.xlu0 %663
      %vm665 = vcmp.eq.f32.partialorder %v662, %v664
      %v666 = vsel %vm665, %v661, inf
      %667 = vmin.xlane.f32.xlu0 %v666
      %v668 = vpop.xlane.xlu0 %667
      %v669 = vcvt.f32.s32 %v668
      %v670 = vcvt.f32.s32 %v664
      %v671 = vshll.u32 %v670, 16
      %v672 = vadd.s32 %v671, %v669
      %v673 = vsel %vm426, %v637, 2147483647
      %v674 = vand.u32 %v673, 65535
      %v675 = vshra.s32 %v673, 16
      %v676 = vcvt.s32.f32 %v674
      %v677 = vcvt.s32.f32 %v675
      %678 = vmin.xlane.f32.xlu0 %v677
      %v679 = vpop.xlane.xlu0 %678
      %vm680 = vcmp.eq.f32.partialorder %v677, %v679
      %v681 = vsel %vm680, %v676, inf
      %682 = vmin.xlane.f32.xlu0 %v681
      %v683 = vpop.xlane.xlu0 %682
      %v684 = vcvt.f32.s32 %v683
      %v685 = vcvt.f32.s32 %v679
      %v686 = vshll.u32 %v685, 16
      %v687 = vadd.s32 %v686, %v684
      %v688 = vsel %vm426, %v638, 2147483647
      %v689 = vand.u32 %v688, 65535
      %v690 = vshra.s32 %v688, 16
      %v691 = vcvt.s32.f32 %v689
      %v692 = vcvt.s32.f32 %v690
      %693 = vmin.xlane.f32.xlu0 %v692
      %v694 = vpop.xlane.xlu0 %693
      %vm695 = vcmp.eq.f32.partialorder %v692, %v694
      %v696 = vsel %vm695, %v691, inf
      %697 = vmin.xlane.f32.xlu0 %v696
      %v698 = vpop.xlane.xlu0 %697
      %v699 = vcvt.f32.s32 %v698
      %v700 = vcvt.f32.s32 %v694
      %v701 = vshll.u32 %v700, 16
      %v702 = vadd.s32 %v701, %v699
      %v703 = vsel %vm426, %v639, 2147483647
      %v704 = vand.u32 %v703, 65535
      %v705 = vshra.s32 %v703, 16
      %v706 = vcvt.s32.f32 %v704
      %v707 = vcvt.s32.f32 %v705
      %708 = vmin.xlane.f32.xlu0 %v707
      %v709 = vpop.xlane.xlu0 %708
      %vm710 = vcmp.eq.f32.partialorder %v707, %v709
      %v711 = vsel %vm710, %v706, inf
      %712 = vmin.xlane.f32.xlu0 %v711
      %v713 = vpop.xlane.xlu0 %712
      %v714 = vcvt.f32.s32 %v713
      %v715 = vcvt.f32.s32 %v709
      %v716 = vshll.u32 %v715, 16
      %v717 = vadd.s32 %v716, %v714
      %v718 = vsel %vm426, %v640, 2147483647
      %v719 = vand.u32 %v718, 65535
      %v720 = vshra.s32 %v718, 16
      %v721 = vcvt.s32.f32 %v719
      %v722 = vcvt.s32.f32 %v720
      %723 = vmin.xlane.f32.xlu0 %v722
      %v724 = vpop.xlane.xlu0 %723
      %vm725 = vcmp.eq.f32.partialorder %v722, %v724
      %v726 = vsel %vm725, %v721, inf
      %727 = vmin.xlane.f32.xlu0 %v726
      %v728 = vpop.xlane.xlu0 %727
      %v729 = vcvt.f32.s32 %v728
      %v730 = vcvt.f32.s32 %v724
      %v731 = vshll.u32 %v730, 16
      %v732 = vadd.s32 %v731, %v729
      %v733 = vsel %vm426, %v641, 2147483647
      %v734 = vand.u32 %v733, 65535
      %v735 = vshra.s32 %v733, 16
      %v736 = vcvt.s32.f32 %v734
      %v737 = vcvt.s32.f32 %v735
      %738 = vmin.xlane.f32.xlu0 %v737
      %v739 = vpop.xlane.xlu0 %738
      %vm740 = vcmp.eq.f32.partialorder %v737, %v739
      %v741 = vsel %vm740, %v736, inf
      %742 = vmin.xlane.f32.xlu0 %v741
      %v743 = vpop.xlane.xlu0 %742
      %v744 = vcvt.f32.s32 %v743
      %v745 = vcvt.f32.s32 %v739
      %v746 = vshll.u32 %v745, 16
      %v747 = vadd.s32 %v746, %v744
      %v748 = vsel %vm426, %v642, 2147483647
      %v749 = vand.u32 %v748, 65535
      %v750 = vshra.s32 %v748, 16
      %v751 = vcvt.s32.f32 %v749
      %v752 = vcvt.s32.f32 %v750
      %753 = vmin.xlane.f32.xlu0 %v752
      %v754 = vpop.xlane.xlu0 %753
      %vm755 = vcmp.eq.f32.partialorder %v752, %v754
      %v756 = vsel %vm755, %v751, inf
      %757 = vmin.xlane.f32.xlu0 %v756
      %v758 = vpop.xlane.xlu0 %757
      %v759 = vcvt.f32.s32 %v758
      %v760 = vcvt.f32.s32 %v754
      %v761 = vshll.u32 %v760, 16
      %v762 = vadd.s32 %v761, %v759
      %vm763 = vcmp.eq.s32.totalorder %v425, %v657
      %vm764 = vcmp.eq.s32.totalorder %v425, %v672
      %vm765 = vcmp.eq.s32.totalorder %v425, %v687
      %vm766 = vcmp.eq.s32.totalorder %v425, %v702
      %vm767 = vcmp.eq.s32.totalorder %v425, %v717
      %vm768 = vcmp.eq.s32.totalorder %v425, %v732
      %vm769 = vcmp.eq.s32.totalorder %v425, %v747
      %vm770 = vcmp.eq.s32.totalorder %v425, %v762
      %v771 = vsel %vm763, -inf, %v595
      %v772 = vsel %vm764, -inf, %v596
      %v773 = vsel %vm765, -inf, %v597
      %v774 = vsel %vm766, -inf, %v598
      %v775 = vsel %vm767, -inf, %v599
      %v776 = vsel %vm768, -inf, %v600
      %v777 = vsel %vm769, -inf, %v601
      %v778 = vsel %vm770, -inf, %v602
      %v779 = vsel %vm426, %v771, -inf
      %780 = vmax.xlane.f32.xlu0 %v779
      %v781 = vpop.xlane.xlu0 %780
      %v782 = vsel %vm426, %v772, -inf
      %783 = vmax.xlane.f32.xlu0 %v782
      %v784 = vpop.xlane.xlu0 %783
      %v785 = vsel %vm426, %v773, -inf
      %786 = vmax.xlane.f32.xlu0 %v785
      %v787 = vpop.xlane.xlu0 %786
      %v788 = vsel %vm426, %v774, -inf
      %789 = vmax.xlane.f32.xlu0 %v788
      %v790 = vpop.xlane.xlu0 %789
      %v791 = vsel %vm426, %v775, -inf
      %792 = vmax.xlane.f32.xlu0 %v791
      %v793 = vpop.xlane.xlu0 %792
      %v794 = vsel %vm426, %v776, -inf
      %795 = vmax.xlane.f32.xlu0 %v794
      %v796 = vpop.xlane.xlu0 %795
      %v797 = vsel %vm426, %v777, -inf
      %798 = vmax.xlane.f32.xlu0 %v797
      %v799 = vpop.xlane.xlu0 %798
      %v800 = vsel %vm426, %v778, -inf
      %801 = vmax.xlane.f32.xlu0 %v800
      %v802 = vpop.xlane.xlu0 %801
      %vm803 = vcmp.eq.f32.partialorder %v771, %v781
      %vm804 = vcmp.eq.f32.partialorder %v772, %v784
      %vm805 = vcmp.eq.f32.partialorder %v773, %v787
      %vm806 = vcmp.eq.f32.partialorder %v774, %v790
      %vm807 = vcmp.eq.f32.partialorder %v775, %v793
      %vm808 = vcmp.eq.f32.partialorder %v776, %v796
      %vm809 = vcmp.eq.f32.partialorder %v777, %v799
      %vm810 = vcmp.eq.f32.partialorder %v778, %v802
      %v811 = vsel %vm803, %v425, 64
      %v812 = vsel %vm804, %v425, 64
      %v813 = vsel %vm805, %v425, 64
      %v814 = vsel %vm806, %v425, 64
      %v815 = vsel %vm807, %v425, 64
      %v816 = vsel %vm808, %v425, 64
      %v817 = vsel %vm809, %v425, 64
      %v818 = vsel %vm810, %v425, 64
      %v819 = vsel %vm426, %v811, 2147483647
      %v820 = vand.u32 %v819, 65535
      %v821 = vshra.s32 %v819, 16
      %v822 = vcvt.s32.f32 %v820
      %v823 = vcvt.s32.f32 %v821
      %824 = vmin.xlane.f32.xlu0 %v823
      %v825 = vpop.xlane.xlu0 %824
      %vm826 = vcmp.eq.f32.partialorder %v823, %v825
      %v827 = vsel %vm826, %v822, inf
      %828 = vmin.xlane.f32.xlu0 %v827
      %v829 = vpop.xlane.xlu0 %828
      %v830 = vcvt.f32.s32 %v829
      %v831 = vcvt.f32.s32 %v825
      %v832 = vshll.u32 %v831, 16
      %v833 = vadd.s32 %v832, %v830
      %v834 = vsel %vm426, %v812, 2147483647
      %v835 = vand.u32 %v834, 65535
      %v836 = vshra.s32 %v834, 16
      %v837 = vcvt.s32.f32 %v835
      %v838 = vcvt.s32.f32 %v836
      %839 = vmin.xlane.f32.xlu0 %v838
      %v840 = vpop.xlane.xlu0 %839
      %vm841 = vcmp.eq.f32.partialorder %v838, %v840
      %v842 = vsel %vm841, %v837, inf
      %843 = vmin.xlane.f32.xlu0 %v842
      %v844 = vpop.xlane.xlu0 %843
      %v845 = vcvt.f32.s32 %v844
      %v846 = vcvt.f32.s32 %v840
      %v847 = vshll.u32 %v846, 16
      %v848 = vadd.s32 %v847, %v845
      %v849 = vsel %vm426, %v813, 2147483647
      %v850 = vand.u32 %v849, 65535
      %v851 = vshra.s32 %v849, 16
      %v852 = vcvt.s32.f32 %v850
      %v853 = vcvt.s32.f32 %v851
      %854 = vmin.xlane.f32.xlu0 %v853
      %v855 = vpop.xlane.xlu0 %854
      %vm856 = vcmp.eq.f32.partialorder %v853, %v855
      %v857 = vsel %vm856, %v852, inf
      %858 = vmin.xlane.f32.xlu0 %v857
      %v859 = vpop.xlane.xlu0 %858
      %v860 = vcvt.f32.s32 %v859
      %v861 = vcvt.f32.s32 %v855
      %v862 = vshll.u32 %v861, 16
      %v863 = vadd.s32 %v862, %v860
      %v864 = vsel %vm426, %v814, 2147483647
      %v865 = vand.u32 %v864, 65535
      %v866 = vshra.s32 %v864, 16
      %v867 = vcvt.s32.f32 %v865
      %v868 = vcvt.s32.f32 %v866
      %869 = vmin.xlane.f32.xlu0 %v868
      %v870 = vpop.xlane.xlu0 %869
      %vm871 = vcmp.eq.f32.partialorder %v868, %v870
      %v872 = vsel %vm871, %v867, inf
      %873 = vmin.xlane.f32.xlu0 %v872
      %v874 = vpop.xlane.xlu0 %873
      %v875 = vcvt.f32.s32 %v874
      %v876 = vcvt.f32.s32 %v870
      %v877 = vshll.u32 %v876, 16
      %v878 = vadd.s32 %v877, %v875
      %v879 = vsel %vm426, %v815, 2147483647
      %v880 = vand.u32 %v879, 65535
      %v881 = vshra.s32 %v879, 16
      %v882 = vcvt.s32.f32 %v880
      %v883 = vcvt.s32.f32 %v881
      %884 = vmin.xlane.f32.xlu0 %v883
      %v885 = vpop.xlane.xlu0 %884
      %vm886 = vcmp.eq.f32.partialorder %v883, %v885
      %v887 = vsel %vm886, %v882, inf
      %888 = vmin.xlane.f32.xlu0 %v887
      %v889 = vpop.xlane.xlu0 %888
      %v890 = vcvt.f32.s32 %v889
      %v891 = vcvt.f32.s32 %v885
      %v892 = vshll.u32 %v891, 16
      %v893 = vadd.s32 %v892, %v890
      %v894 = vsel %vm426, %v816, 2147483647
      %v895 = vand.u32 %v894, 65535
      %v896 = vshra.s32 %v894, 16
      %v897 = vcvt.s32.f32 %v895
      %v898 = vcvt.s32.f32 %v896
      %899 = vmin.xlane.f32.xlu0 %v898
      %v900 = vpop.xlane.xlu0 %899
      %vm901 = vcmp.eq.f32.partialorder %v898, %v900
      %v902 = vsel %vm901, %v897, inf
      %903 = vmin.xlane.f32.xlu0 %v902
      %v904 = vpop.xlane.xlu0 %903
      %v905 = vcvt.f32.s32 %v904
      %v906 = vcvt.f32.s32 %v900
      %v907 = vshll.u32 %v906, 16
      %v908 = vadd.s32 %v907, %v905
      %v909 = vsel %vm426, %v817, 2147483647
      %v910 = vand.u32 %v909, 65535
      %v911 = vshra.s32 %v909, 16
      %v912 = vcvt.s32.f32 %v910
      %v913 = vcvt.s32.f32 %v911
      %914 = vmin.xlane.f32.xlu0 %v913
      %v915 = vpop.xlane.xlu0 %914
      %vm916 = vcmp.eq.f32.partialorder %v913, %v915
      %v917 = vsel %vm916, %v912, inf
      %918 = vmin.xlane.f32.xlu0 %v917
      %v919 = vpop.xlane.xlu0 %918
      %v920 = vcvt.f32.s32 %v919
      %v921 = vcvt.f32.s32 %v915
      %v922 = vshll.u32 %v921, 16
      %v923 = vadd.s32 %v922, %v920
      %v924 = vsel %vm426, %v818, 2147483647
      %v925 = vand.u32 %v924, 65535
      %v926 = vshra.s32 %v924, 16
      %v927 = vcvt.s32.f32 %v925
      %v928 = vcvt.s32.f32 %v926
      %929 = vmin.xlane.f32.xlu0 %v928
      %v930 = vpop.xlane.xlu0 %929
      %vm931 = vcmp.eq.f32.partialorder %v928, %v930
      %v932 = vsel %vm931, %v927, inf
      %933 = vmin.xlane.f32.xlu0 %v932
      %v934 = vpop.xlane.xlu0 %933
      %v935 = vcvt.f32.s32 %v934
      %v936 = vcvt.f32.s32 %v930
      %v937 = vshll.u32 %v936, 16
      %v938 = vadd.s32 %v937, %v935
      %vm939 = vcmp.eq.s32.totalorder %v425, %v833
      %vm940 = vcmp.eq.s32.totalorder %v425, %v848
      %vm941 = vcmp.eq.s32.totalorder %v425, %v863
      %vm942 = vcmp.eq.s32.totalorder %v425, %v878
      %vm943 = vcmp.eq.s32.totalorder %v425, %v893
      %vm944 = vcmp.eq.s32.totalorder %v425, %v908
      %vm945 = vcmp.eq.s32.totalorder %v425, %v923
      %vm946 = vcmp.eq.s32.totalorder %v425, %v938
      %v947 = vsel %vm939, -inf, %v771
      %v948 = vsel %vm940, -inf, %v772
      %v949 = vsel %vm941, -inf, %v773
      %v950 = vsel %vm942, -inf, %v774
      %v951 = vsel %vm943, -inf, %v775
      %v952 = vsel %vm944, -inf, %v776
      %v953 = vsel %vm945, -inf, %v777
      %v954 = vsel %vm946, -inf, %v778
      %v955 = vsel %vm426, %v947, -inf
      %956 = vmax.xlane.f32.xlu0 %v955
      %v957 = vpop.xlane.xlu0 %956
      %v958 = vsel %vm426, %v948, -inf
      %959 = vmax.xlane.f32.xlu0 %v958
      %v960 = vpop.xlane.xlu0 %959
      %v961 = vsel %vm426, %v949, -inf
      %962 = vmax.xlane.f32.xlu0 %v961
      %v963 = vpop.xlane.xlu0 %962
      %v964 = vsel %vm426, %v950, -inf
      %965 = vmax.xlane.f32.xlu0 %v964
      %v966 = vpop.xlane.xlu0 %965
      %v967 = vsel %vm426, %v951, -inf
      %968 = vmax.xlane.f32.xlu0 %v967
      %v969 = vpop.xlane.xlu0 %968
      %v970 = vsel %vm426, %v952, -inf
      %971 = vmax.xlane.f32.xlu0 %v970
      %v972 = vpop.xlane.xlu0 %971
      %v973 = vsel %vm426, %v953, -inf
      %974 = vmax.xlane.f32.xlu0 %v973
      %v975 = vpop.xlane.xlu0 %974
      %v976 = vsel %vm426, %v954, -inf
      %977 = vmax.xlane.f32.xlu0 %v976
      %v978 = vpop.xlane.xlu0 %977
      %vm979 = vcmp.eq.f32.partialorder %v947, %v957
      %vm980 = vcmp.eq.f32.partialorder %v948, %v960
      %vm981 = vcmp.eq.f32.partialorder %v949, %v963
      %vm982 = vcmp.eq.f32.partialorder %v950, %v966
      %vm983 = vcmp.eq.f32.partialorder %v951, %v969
      %vm984 = vcmp.eq.f32.partialorder %v952, %v972
      %vm985 = vcmp.eq.f32.partialorder %v953, %v975
      %vm986 = vcmp.eq.f32.partialorder %v954, %v978
      %v987 = vsel %vm979, %v425, 64
      %v988 = vsel %vm980, %v425, 64
      %v989 = vsel %vm981, %v425, 64
      %v990 = vsel %vm982, %v425, 64
      %v991 = vsel %vm983, %v425, 64
      %v992 = vsel %vm984, %v425, 64
      %v993 = vsel %vm985, %v425, 64
      %v994 = vsel %vm986, %v425, 64
      %v995 = vsel %vm426, %v987, 2147483647
      %v996 = vand.u32 %v995, 65535
      %v997 = vshra.s32 %v995, 16
      %v998 = vcvt.s32.f32 %v996
      %v999 = vcvt.s32.f32 %v997
      %1000 = vmin.xlane.f32.xlu0 %v999
      %v1001 = vpop.xlane.xlu0 %1000
      %vm1002 = vcmp.eq.f32.partialorder %v999, %v1001
      %v1003 = vsel %vm1002, %v998, inf
      %1004 = vmin.xlane.f32.xlu0 %v1003
      %v1005 = vpop.xlane.xlu0 %1004
      %v1006 = vcvt.f32.s32 %v1005
      %v1007 = vcvt.f32.s32 %v1001
      %v1008 = vshll.u32 %v1007, 16
      %v1009 = vadd.s32 %v1008, %v1006
      %v1010 = vsel %vm426, %v988, 2147483647
      %v1011 = vand.u32 %v1010, 65535
      %v1012 = vshra.s32 %v1010, 16
      %v1013 = vcvt.s32.f32 %v1011
      %v1014 = vcvt.s32.f32 %v1012
      %1015 = vmin.xlane.f32.xlu0 %v1014
      %v1016 = vpop.xlane.xlu0 %1015
      %vm1017 = vcmp.eq.f32.partialorder %v1014, %v1016
      %v1018 = vsel %vm1017, %v1013, inf
      %1019 = vmin.xlane.f32.xlu0 %v1018
      %v1020 = vpop.xlane.xlu0 %1019
      %v1021 = vcvt.f32.s32 %v1020
      %v1022 = vcvt.f32.s32 %v1016
      %v1023 = vshll.u32 %v1022, 16
      %v1024 = vadd.s32 %v1023, %v1021
      %v1025 = vsel %vm426, %v989, 2147483647
      %v1026 = vand.u32 %v1025, 65535
      %v1027 = vshra.s32 %v1025, 16
      %v1028 = vcvt.s32.f32 %v1026
      %v1029 = vcvt.s32.f32 %v1027
      %1030 = vmin.xlane.f32.xlu0 %v1029
      %v1031 = vpop.xlane.xlu0 %1030
      %vm1032 = vcmp.eq.f32.partialorder %v1029, %v1031
      %v1033 = vsel %vm1032, %v1028, inf
      %1034 = vmin.xlane.f32.xlu0 %v1033
      %v1035 = vpop.xlane.xlu0 %1034
      %v1036 = vcvt.f32.s32 %v1035
      %v1037 = vcvt.f32.s32 %v1031
      %v1038 = vshll.u32 %v1037, 16
      %v1039 = vadd.s32 %v1038, %v1036
      %v1040 = vsel %vm426, %v990, 2147483647
      %v1041 = vand.u32 %v1040, 65535
      %v1042 = vshra.s32 %v1040, 16
      %v1043 = vcvt.s32.f32 %v1041
      %v1044 = vcvt.s32.f32 %v1042
      %1045 = vmin.xlane.f32.xlu0 %v1044
      %v1046 = vpop.xlane.xlu0 %1045
      %vm1047 = vcmp.eq.f32.partialorder %v1044, %v1046
      %v1048 = vsel %vm1047, %v1043, inf
      %1049 = vmin.xlane.f32.xlu0 %v1048
      %v1050 = vpop.xlane.xlu0 %1049
      %v1051 = vcvt.f32.s32 %v1050
      %v1052 = vcvt.f32.s32 %v1046
      %v1053 = vshll.u32 %v1052, 16
      %v1054 = vadd.s32 %v1053, %v1051
      %v1055 = vsel %vm426, %v991, 2147483647
      %v1056 = vand.u32 %v1055, 65535
      %v1057 = vshra.s32 %v1055, 16
      %v1058 = vcvt.s32.f32 %v1056
      %v1059 = vcvt.s32.f32 %v1057
      %1060 = vmin.xlane.f32.xlu0 %v1059
      %v1061 = vpop.xlane.xlu0 %1060
      %vm1062 = vcmp.eq.f32.partialorder %v1059, %v1061
      %v1063 = vsel %vm1062, %v1058, inf
      %1064 = vmin.xlane.f32.xlu0 %v1063
      %v1065 = vpop.xlane.xlu0 %1064
      %v1066 = vcvt.f32.s32 %v1065
      %v1067 = vcvt.f32.s32 %v1061
      %v1068 = vshll.u32 %v1067, 16
      %v1069 = vadd.s32 %v1068, %v1066
      %v1070 = vsel %vm426, %v992, 2147483647
      %v1071 = vand.u32 %v1070, 65535
      %v1072 = vshra.s32 %v1070, 16
      %v1073 = vcvt.s32.f32 %v1071
      %v1074 = vcvt.s32.f32 %v1072
      %1075 = vmin.xlane.f32.xlu0 %v1074
      %v1076 = vpop.xlane.xlu0 %1075
      %vm1077 = vcmp.eq.f32.partialorder %v1074, %v1076
      %v1078 = vsel %vm1077, %v1073, inf
      %1079 = vmin.xlane.f32.xlu0 %v1078
      %v1080 = vpop.xlane.xlu0 %1079
      %v1081 = vcvt.f32.s32 %v1080
      %v1082 = vcvt.f32.s32 %v1076
      %v1083 = vshll.u32 %v1082, 16
      %v1084 = vadd.s32 %v1083, %v1081
      %v1085 = vsel %vm426, %v993, 2147483647
      %v1086 = vand.u32 %v1085, 65535
      %v1087 = vshra.s32 %v1085, 16
      %v1088 = vcvt.s32.f32 %v1086
      %v1089 = vcvt.s32.f32 %v1087
      %1090 = vmin.xlane.f32.xlu0 %v1089
      %v1091 = vpop.xlane.xlu0 %1090
      %vm1092 = vcmp.eq.f32.partialorder %v1089, %v1091
      %v1093 = vsel %vm1092, %v1088, inf
      %1094 = vmin.xlane.f32.xlu0 %v1093
      %v1095 = vpop.xlane.xlu0 %1094
      %v1096 = vcvt.f32.s32 %v1095
      %v1097 = vcvt.f32.s32 %v1091
      %v1098 = vshll.u32 %v1097, 16
      %v1099 = vadd.s32 %v1098, %v1096
      %v1100 = vsel %vm426, %v994, 2147483647
      %v1101 = vand.u32 %v1100, 65535
      %v1102 = vshra.s32 %v1100, 16
      %v1103 = vcvt.s32.f32 %v1101
      %v1104 = vcvt.s32.f32 %v1102
      %1105 = vmin.xlane.f32.xlu0 %v1104
      %v1106 = vpop.xlane.xlu0 %1105
      %vm1107 = vcmp.eq.f32.partialorder %v1104, %v1106
      %v1108 = vsel %vm1107, %v1103, inf
      %1109 = vmin.xlane.f32.xlu0 %v1108
      %v1110 = vpop.xlane.xlu0 %1109
      %v1111 = vcvt.f32.s32 %v1110
      %v1112 = vcvt.f32.s32 %v1106
      %v1113 = vshll.u32 %v1112, 16
      %v1114 = vadd.s32 %v1113, %v1111
      %v1115 = vmul.f32 %v429, 0.17677669
      %v1116 = vmul.f32 %v432, 0.17677669
      %v1117 = vmul.f32 %v435, 0.17677669
      %v1118 = vmul.f32 %v438, 0.17677669
      %v1119 = vmul.f32 %v441, 0.17677669
      %v1120 = vmul.f32 %v444, 0.17677669
      %v1121 = vmul.f32 %v447, 0.17677669
      %v1122 = vmul.f32 %v450, 0.17677669
      %v1123 = vmul.f32 %v605, 0.17677669
      %v1124 = vmul.f32 %v608, 0.17677669
      %v1125 = vmul.f32 %v611, 0.17677669
      %v1126 = vmul.f32 %v614, 0.17677669
      %v1127 = vmul.f32 %v617, 0.17677669
      %v1128 = vmul.f32 %v620, 0.17677669
      %v1129 = vmul.f32 %v623, 0.17677669
      %v1130 = vmul.f32 %v626, 0.17677669
      %v1131 = vmul.f32 %v781, 0.17677669
      %v1132 = vmul.f32 %v784, 0.17677669
      %v1133 = vmul.f32 %v787, 0.17677669
      %v1134 = vmul.f32 %v790, 0.17677669
      %v1135 = vmul.f32 %v793, 0.17677669
      %v1136 = vmul.f32 %v796, 0.17677669
      %v1137 = vmul.f32 %v799, 0.17677669
      %v1138 = vmul.f32 %v802, 0.17677669
      %v1139 = vmul.f32 %v957, 0.17677669
      %v1140 = vmul.f32 %v960, 0.17677669
      %v1141 = vmul.f32 %v963, 0.17677669
      %v1142 = vmul.f32 %v966, 0.17677669
      %v1143 = vmul.f32 %v969, 0.17677669
      %v1144 = vmul.f32 %v972, 0.17677669
      %v1145 = vmul.f32 %v975, 0.17677669
      %v1146 = vmul.f32 %v978, 0.17677669
      %v1147 = vsub.f32 %v1115, %v1115
      %v1148 = vsub.f32 %v1116, %v1116
      %v1149 = vsub.f32 %v1117, %v1117
      %v1150 = vsub.f32 %v1118, %v1118
      %v1151 = vsub.f32 %v1119, %v1119
      %v1152 = vsub.f32 %v1120, %v1120
      %v1153 = vsub.f32 %v1121, %v1121
      %v1154 = vsub.f32 %v1122, %v1122
      %v1155 = vmul.f32 %v1147, 1.442695
      %v1156 = vpow.pop %v1155
      %v1157 = vmul.f32 %v1148, 1.442695
      %v1158 = vpow.pop %v1157
      %v1159 = vmul.f32 %v1149, 1.442695
      %v1160 = vpow.pop %v1159
      %v1161 = vmul.f32 %v1150, 1.442695
      %v1162 = vpow.pop %v1161
      %v1163 = vmul.f32 %v1151, 1.442695
      %v1164 = vpow.pop %v1163
      %v1165 = vmul.f32 %v1152, 1.442695
      %v1166 = vpow.pop %v1165
      %v1167 = vmul.f32 %v1153, 1.442695
      %v1168 = vpow.pop %v1167
      %v1169 = vmul.f32 %v1154, 1.442695
      %v1170 = vpow.pop %v1169
      %v1171 = vsub.f32 %v1123, %v1115
      %v1172 = vsub.f32 %v1124, %v1116
      %v1173 = vsub.f32 %v1125, %v1117
      %v1174 = vsub.f32 %v1126, %v1118
      %v1175 = vsub.f32 %v1127, %v1119
      %v1176 = vsub.f32 %v1128, %v1120
      %v1177 = vsub.f32 %v1129, %v1121
      %v1178 = vsub.f32 %v1130, %v1122
      %v1179 = vmul.f32 %v1171, 1.442695
      %v1180 = vpow.pop %v1179
      %v1181 = vmul.f32 %v1172, 1.442695
      %v1182 = vpow.pop %v1181
      %v1183 = vmul.f32 %v1173, 1.442695
      %v1184 = vpow.pop %v1183
      %v1185 = vmul.f32 %v1174, 1.442695
      %v1186 = vpow.pop %v1185
      %v1187 = vmul.f32 %v1175, 1.442695
      %v1188 = vpow.pop %v1187
      %v1189 = vmul.f32 %v1176, 1.442695
      %v1190 = vpow.pop %v1189
      %v1191 = vmul.f32 %v1177, 1.442695
      %v1192 = vpow.pop %v1191
      %v1193 = vmul.f32 %v1178, 1.442695
      %v1194 = vpow.pop %v1193
      %v1195 = vsub.f32 %v1131, %v1115
      %v1196 = vsub.f32 %v1132, %v1116
      %v1197 = vsub.f32 %v1133, %v1117
      %v1198 = vsub.f32 %v1134, %v1118
      %v1199 = vsub.f32 %v1135, %v1119
      %v1200 = vsub.f32 %v1136, %v1120
      %v1201 = vsub.f32 %v1137, %v1121
      %v1202 = vsub.f32 %v1138, %v1122
      %v1203 = vmul.f32 %v1195, 1.442695
      %v1204 = vpow.pop %v1203
      %v1205 = vmul.f32 %v1196, 1.442695
      %v1206 = vpow.pop %v1205
      %v1207 = vmul.f32 %v1197, 1.442695
      %v1208 = vpow.pop %v1207
      %v1209 = vmul.f32 %v1198, 1.442695
      %v1210 = vpow.pop %v1209
      %v1211 = vmul.f32 %v1199, 1.442695
      %v1212 = vpow.pop %v1211
      %v1213 = vmul.f32 %v1200, 1.442695
      %v1214 = vpow.pop %v1213
      %v1215 = vmul.f32 %v1201, 1.442695
      %v1216 = vpow.pop %v1215
      %v1217 = vmul.f32 %v1202, 1.442695
      %v1218 = vpow.pop %v1217
      %v1219 = vsub.f32 %v1139, %v1115
      %v1220 = vsub.f32 %v1140, %v1116
      %v1221 = vsub.f32 %v1141, %v1117
      %v1222 = vsub.f32 %v1142, %v1118
      %v1223 = vsub.f32 %v1143, %v1119
      %v1224 = vsub.f32 %v1144, %v1120
      %v1225 = vsub.f32 %v1145, %v1121
      %v1226 = vsub.f32 %v1146, %v1122
      %v1227 = vmul.f32 %v1219, 1.442695
      %v1228 = vpow.pop %v1227
      %v1229 = vmul.f32 %v1220, 1.442695
      %v1230 = vpow.pop %v1229
      %v1231 = vmul.f32 %v1221, 1.442695
      %v1232 = vpow.pop %v1231
      %v1233 = vmul.f32 %v1222, 1.442695
      %v1234 = vpow.pop %v1233
      %v1235 = vmul.f32 %v1223, 1.442695
      %v1236 = vpow.pop %v1235
      %v1237 = vmul.f32 %v1224, 1.442695
      %v1238 = vpow.pop %v1237
      %v1239 = vmul.f32 %v1225, 1.442695
      %v1240 = vpow.pop %v1239
      %v1241 = vmul.f32 %v1226, 1.442695
      %v1242 = vpow.pop %v1241
      %v1243 = vadd.f32 %v1156, %v1180
      %v1244 = vadd.f32 %v1158, %v1182
      %v1245 = vadd.f32 %v1160, %v1184
      %v1246 = vadd.f32 %v1162, %v1186
      %v1247 = vadd.f32 %v1164, %v1188
      %v1248 = vadd.f32 %v1166, %v1190
      %v1249 = vadd.f32 %v1168, %v1192
      %v1250 = vadd.f32 %v1170, %v1194
      %v1251 = vadd.f32 %v1243, %v1204
      %v1252 = vadd.f32 %v1244, %v1206
      %v1253 = vadd.f32 %v1245, %v1208
      %v1254 = vadd.f32 %v1246, %v1210
      %v1255 = vadd.f32 %v1247, %v1212
      %v1256 = vadd.f32 %v1248, %v1214
      %v1257 = vadd.f32 %v1249, %v1216
      %v1258 = vadd.f32 %v1250, %v1218
      %v1259 = vadd.f32 %v1251, %v1228
      %v1260 = vadd.f32 %v1252, %v1230
      %v1261 = vadd.f32 %v1253, %v1232
      %v1262 = vadd.f32 %v1254, %v1234
      %v1263 = vadd.f32 %v1255, %v1236
      %v1264 = vadd.f32 %v1256, %v1238
      %v1265 = vadd.f32 %v1257, %v1240
      %v1266 = vadd.f32 %v1258, %v1242
      %v1267 = vrcp.pop %v1259
      %v1268 = vmul.f32 1.0, %v1267
      %v1269 = vrcp.pop %v1260
      %v1270 = vmul.f32 1.0, %v1269
      %v1271 = vrcp.pop %v1261
      %v1272 = vmul.f32 1.0, %v1271
      %v1273 = vrcp.pop %v1262
      %v1274 = vmul.f32 1.0, %v1273
      %v1275 = vrcp.pop %v1263
      %v1276 = vmul.f32 1.0, %v1275
      %v1277 = vrcp.pop %v1264
      %v1278 = vmul.f32 1.0, %v1277
      %v1279 = vrcp.pop %v1265
      %v1280 = vmul.f32 1.0, %v1279
      %v1281 = vrcp.pop %v1266
      %v1282 = vmul.f32 1.0, %v1281
      %vm1283 = vcmask 7168
      %v1284 = vsel %vm1283, %v1156, %v1180
      %v1285 = vsel %vm1283, %v1158, %v1182
      %v1286 = vsel %vm1283, %v1160, %v1184
      %v1287 = vsel %vm1283, %v1162, %v1186
      %v1288 = vsel %vm1283, %v1164, %v1188
      %v1289 = vsel %vm1283, %v1166, %v1190
      %v1290 = vsel %vm1283, %v1168, %v1192
      %v1291 = vsel %vm1283, %v1170, %v1194
      %vm1292 = vcmask 15360
      %v1293 = vsel %vm1292, %v1284, %v1204
      %v1294 = vsel %vm1292, %v1285, %v1206
      %v1295 = vsel %vm1292, %v1286, %v1208
      %v1296 = vsel %vm1292, %v1287, %v1210
      %v1297 = vsel %vm1292, %v1288, %v1212
      %v1298 = vsel %vm1292, %v1289, %v1214
      %v1299 = vsel %vm1292, %v1290, %v1216
      %v1300 = vsel %vm1292, %v1291, %v1218
      %vm1301 = vcmask 23552
      %v1302 = vsel %vm1301, %v1293, %v1228
      %v1303 = vsel %vm1301, %v1294, %v1230
      %v1304 = vsel %vm1301, %v1295, %v1232
      %v1305 = vsel %vm1301, %v1296, %v1234
      %v1306 = vsel %vm1301, %v1297, %v1236
      %v1307 = vsel %vm1301, %v1298, %v1238
      %v1308 = vsel %vm1301, %v1299, %v1240
      %v1309 = vsel %vm1301, %v1300, %v1242
      %v1310 = vmul.f32 %v1302, %v1268
      %v1311 = vmul.f32 %v1303, %v1270
      %v1312 = vmul.f32 %v1304, %v1272
      %v1313 = vmul.f32 %v1305, %v1274
      %v1314 = vmul.f32 %v1306, %v1276
      %v1315 = vmul.f32 %v1307, %v1278
      %v1316 = vmul.f32 %v1308, %v1280
      %v1317 = vmul.f32 %v1309, %v1282
      %vm1318 = vcmask 31744
      %1319 = vst.msk [vmem:[%s242] sm:$0xff] %vm1318, %v1310
      %1320 = vst.msk [vmem:[%s242 + $0x8] sm:$0xff] %vm1318, %v1311
      %1321 = vst.msk [vmem:[%s242 + $0x10] sm:$0xff] %vm1318, %v1312
      %1322 = vst.msk [vmem:[%s242 + $0x18] sm:$0xff] %vm1318, %v1313
      %1323 = vst.msk [vmem:[%s242 + $0x20] sm:$0xff] %vm1318, %v1314
      %1324 = vst.msk [vmem:[%s242 + $0x28] sm:$0xff] %vm1318, %v1315
      %1325 = vst.msk [vmem:[%s242 + $0x30] sm:$0xff] %vm1318, %v1316
      %1326 = vst.msk [vmem:[%s242 + $0x38] sm:$0xff] %vm1318, %v1317
      %v1327 = vsel %vm1283, %v481, %v657
      %v1328 = vsel %vm1283, %v496, %v672
      %v1329 = vsel %vm1283, %v511, %v687
      %v1330 = vsel %vm1283, %v526, %v702
      %v1331 = vsel %vm1283, %v541, %v717
      %v1332 = vsel %vm1283, %v556, %v732
      %v1333 = vsel %vm1283, %v571, %v747
      %v1334 = vsel %vm1283, %v586, %v762
      %v1335 = vsel %vm1292, %v1327, %v833
      %v1336 = vsel %vm1292, %v1328, %v848
      %v1337 = vsel %vm1292, %v1329, %v863
      %v1338 = vsel %vm1292, %v1330, %v878
      %v1339 = vsel %vm1292, %v1331, %v893
      %v1340 = vsel %vm1292, %v1332, %v908
      %v1341 = vsel %vm1292, %v1333, %v923
      %v1342 = vsel %vm1292, %v1334, %v938
      %v1343 = vsel %vm1301, %v1335, %v1009
      %v1344 = vsel %vm1301, %v1336, %v1024
      %v1345 = vsel %vm1301, %v1337, %v1039
      %v1346 = vsel %vm1301, %v1338, %v1054
      %v1347 = vsel %vm1301, %v1339, %v1069
      %v1348 = vsel %vm1301, %v1340, %v1084
      %v1349 = vsel %vm1301, %v1341, %v1099
      %v1350 = vsel %vm1301, %v1342, %v1114
      %1351 = vst.msk [vmem:[%s252] sm:$0xff] %vm1318, %v1343
      %1352 = vst.msk [vmem:[%s252 + $0x8] sm:$0xff] %vm1318, %v1344
      %1353 = vst.msk [vmem:[%s252 + $0x10] sm:$0xff] %vm1318, %v1345
      %1354 = vst.msk [vmem:[%s252 + $0x18] sm:$0xff] %vm1318, %v1346
      %1355 = vst.msk [vmem:[%s252 + $0x20] sm:$0xff] %vm1318, %v1347
      %1356 = vst.msk [vmem:[%s252 + $0x28] sm:$0xff] %vm1318, %v1348
      %1357 = vst.msk [vmem:[%s252 + $0x30] sm:$0xff] %vm1318, %v1349
      %1358 = vst.msk [vmem:[%s252 + $0x38] sm:$0xff] %vm1318, %v1350
      %s1359 = smul.u32 8, %s20
      %p1360 = scmp.lt.s32.totalorder %s19, 1
      %s1361 = scalar_select %p1360, %s19, 1
      %p1362 = scmp.lt.s32.totalorder %s1359, 7
      %s1363 = scalar_select %p1362, %s1359, 7
      %s1364 = smul.addr %s1361, 8
      %s1365 = sadd.s32 %s1363, %s1364
      %s1366 = smul.addr %s1365, 8
      %s1367 = scalar_lea.vmem %s2, %s1366
      %s1368 = smul.u32 8, %s20
      %p1369 = scmp.lt.s32.totalorder %s19, 1
      %s1370 = scalar_select %p1369, %s19, 1
      %p1371 = scmp.lt.s32.totalorder %s1368, 7
      %s1372 = scalar_select %p1371, %s1368, 7
      %s1373 = smul.addr %s1370, 8
      %s1374 = sadd.s32 %s1372, %s1373
      %s1375 = smul.addr %s1374, 8
      %s1376 = scalar_lea.vmem %s3, %s1375
      // Predicated region
      $region29: #{tpu_custom_call.1} parent=27 // pred_check
        %p1377 = pneg %p101
      $region30: #{tpu_custom_call.1} parent=27 // pred_check_branch
        %1379 = sbr.rel (%p1377) target = $region32
      $region31: #{tpu_custom_call.1} parent=27 // pred_region
        %s1380 = smul.u32 8, %s20
      $region32: #{tpu_custom_call.1} parent=27 // pred_fallthru
        _
      // Predicated region
      $region33: #{tpu_custom_call.1} parent=27 // pred_check
        %p1381 = pneg %p129
      $region34: #{tpu_custom_call.1} parent=27 // pred_check_branch
        %1383 = sbr.rel (%p1381) target = $region36
      $region35: #{tpu_custom_call.1} parent=27 // pred_region
        %s1384 = smul.u32 8, %s20
      $region36: #{tpu_custom_call.1} parent=27 // pred_fallthru
        _
    $region28: #{tpu_custom_call.1} parent=5 // pred_fallthru
      _
    %p1385 = scmp.le.s32.totalorder 2, %s10
    // Predicated region
    $region37: #{tpu_custom_call.1} parent=5 // pred_check
      %p1386 = pneg %p1385
    $region38: #{tpu_custom_call.1} parent=5 // pred_check_branch
      %1388 = sbr.rel (%p1386) target = $region40
    $region39: #{tpu_custom_call.1} parent=5 // pred_region
      %s1389 = ssub.s32 %s10, 2
      // Predicated region
      $region41: #{tpu_custom_call.1} parent=39 // pred_check
        %p1390 = pneg %p107
      $region42: #{tpu_custom_call.1} parent=39 // pred_check_branch
        %1392 = sbr.rel (%p1390) target = $region44
      $region43: #{tpu_custom_call.1} parent=39 // pred_region
        %s1393 = smul.u32 8, %s22
        %p1394 = scmp.lt.s32.totalorder %s21, 1
        %s1395 = scalar_select %p1394, %s21, 1
        %p1396 = scmp.lt.s32.totalorder %s1393, 7
        %s1397 = scalar_select %p1396, %s1393, 7
        %s1398 = smul.addr %s1395, 8
        %s1399 = sadd.s32 %s1397, %s1398
        %s1400 = smul.addr %s1399, 8
        %s1401 = scalar_lea.vmem %s2, %s1400
      $region44: #{tpu_custom_call.1} parent=39 // pred_fallthru
        _
      // Predicated region
      $region45: #{tpu_custom_call.1} parent=39 // pred_check
        %p1402 = pneg %p135
      $region46: #{tpu_custom_call.1} parent=39 // pred_check_branch
        %1404 = sbr.rel (%p1402) target = $region48
      $region47: #{tpu_custom_call.1} parent=39 // pred_region
        %s1405 = smul.u32 8, %s22
        %p1406 = scmp.lt.s32.totalorder %s21, 1
        %s1407 = scalar_select %p1406, %s21, 1
        %p1408 = scmp.lt.s32.totalorder %s1405, 7
        %s1409 = scalar_select %p1408, %s1405, 7
        %s1410 = smul.addr %s1407, 8
        %s1411 = sadd.s32 %s1409, %s1410
        %s1412 = smul.addr %s1411, 8
        %s1413 = scalar_lea.vmem %s3, %s1412
      $region48: #{tpu_custom_call.1} parent=39 // pred_fallthru
        _
    $region40: #{tpu_custom_call.1} parent=5 // pred_fallthru
      _
  $region6: #{tpu_custom_call.1} parent=0 // loop_footer
    %s14 = sadd.s32 1, %s10
  $region7: #{tpu_custom_call.1} parent=0 // loop_footer_branch
    %9 = sbr.rel target = $region3
  $region8: #{tpu_custom_call.1} parent=0 // loop_exit
    _

</llo_original>
